<compile_context>
chip_gen: v6e
topology: v6e:2x2x1
jax: 0.10.0
libtpu: 0.0.40
codegen_flags: <defaults>
</compile_context>

<pallas_src>
import jax
import jax.numpy as jnp
from jax.experimental import pallas as pl
from jax.experimental.pallas import tpu as pltpu


# ----------------------------- fused kernel ---------------------------------


def make_fused_kernel(T, Bp, H, num_layers):
    """Build the fused kernel (all LSTM layers + MLP head, single call).

    Kernel ref order:
      x_ref                       (T*Bp, D)  time-major rows, batch padded
      layer 0:                    wih0 (D, 4H), whh0 (H, 4H), b0 (1, 4H)
                                  (i/f/o gate columns pre-scaled by 0.5)
      layers 1..L-1:              w_stk (2H, 4H) = [wih; whh], b (1, 4H)
                                  (i/f/o gate columns pre-scaled by 0.5)
      head:                       w1 (H,H), b1 (1,H), w2, b2, w3, b3,
                                  wo (H,1), bo (1,1)
      out_ref                     (Bp, 1)
    """

    def kernel(*refs):
        idx = 0
        x_ref = refs[idx]; idx += 1
        wih0_ref, whh0_ref, b0_ref = refs[idx:idx + 3]; idx += 3
        deep_refs = []
        for _ in range(1, num_layers):
            deep_refs.append((refs[idx], refs[idx + 1])); idx += 2
        w1, b1, w2, b2, w3, b3, wo, bo = refs[idx:idx + 8]; idx += 8
        out_ref = refs[idx]

        # Per-lane affine that recovers the gate activations from one tanh:
        #   i/f/o lanes (preactivation already halved in the weights):
        #       sigmoid(x) = 0.5 * tanh(x/2) + 0.5
        #   g lanes:  tanh(x)  (mul 1, add 0)
        # Built once (hoisted), one vreg each.
        lane = jax.lax.broadcasted_iota(jnp.int32, (Bp, 4 * H), 1)
        is_g = (lane >= 2 * H) & (lane < 3 * H)
        gate_mul = jnp.where(is_g, jnp.float32(1.0), jnp.float32(0.5))
        gate_add = jnp.where(is_g, jnp.float32(0.0), jnp.float32(0.5))

        def cell(g, c):
            # One full-128-lane tanh (EUP) + one per-lane FMA (VALU slack).
            act = jnp.tanh(g) * gate_mul + gate_add
            i_g = act[:, 0 * H:1 * H]
            f_g = act[:, 1 * H:2 * H]
            g_g = act[:, 2 * H:3 * H]
            o_g = act[:, 3 * H:4 * H]
            c_new = f_g * c + i_g * g_g
            h_new = o_g * jnp.tanh(c_new)       # second (and last) EUP push
            return h_new, c_new
        # TODO(synk): if the four 32-lane gate extractions show up as XLU
        # traffic on the critical path in the bundle dump, permute the gate
        # columns at param-prep time so at most one pltpu.roll is needed.

        # Hoisted, bias-folded layer-0 input projection: ONE MXU op covering
        # all time steps, off the recurrent critical path.
        gates_x0 = jnp.dot(x_ref[...], wih0_ref[...],
                           preferred_element_type=jnp.float32) + b0_ref[...]
        whh0 = whh0_ref[...]                                  # (H, 4H)

        # Deep-layer weights loaded once; bias broadcast hoisted out of loop.
        deep_w = [(w_ref[...], jnp.broadcast_to(b_ref[...], (Bp, 4 * H)))
                  for (w_ref, b_ref) in deep_refs]

        zeros = jnp.zeros((Bp, H), jnp.float32)
        h = [zeros] * num_layers
        c = [zeros] * num_layers

        # Wavefront: wave w runs layer l at time t = w - l, fully unrolled.
        # Steps within a wave are independent -> they fill each other's
        # MXU/EUP pipeline bubbles; critical path is T + num_layers - 1 steps.
        for w in range(T + num_layers - 1):
            h_prev = list(h)                    # values from the previous wave
            if w < T:                           # layer 0, time t = w
                g0 = gates_x0[w * Bp:(w + 1) * Bp, :] + jnp.dot(
                    h[0], whh0, preferred_element_type=jnp.float32)
                h[0], c[0] = cell(g0, c[0])
            for l in range(1, num_layers):      # layer l, time t = w - l
                t = w - l
                if 0 <= t < T:
                    wl, bl = deep_w[l - 1]
                    # Fused input+recurrent projection: one (Bp,2H)x(2H,4H)
                    # vmatmul instead of two (Bp,H)x(H,4H).
                    inp = jnp.concatenate([h_prev[l - 1], h[l]], axis=1)
                    gl = jnp.dot(inp, wl,
                                 preferred_element_type=jnp.float32) + bl
                    h[l], c[l] = cell(gl, c[l])

        # MLP head on the last layer's final hidden state (== out[:, -1, :]).
        hh = h[num_layers - 1]
        hh = jnp.maximum(
            jnp.dot(hh, w1[...], preferred_element_type=jnp.float32) + b1[...], 0.0)
        hh = jnp.maximum(
            jnp.dot(hh, w2[...], preferred_element_type=jnp.float32) + b2[...], 0.0)
        hh = jnp.maximum(
            jnp.dot(hh, w3[...], preferred_element_type=jnp.float32) + b3[...], 0.0)
        out_ref[...] = (
            jnp.dot(hh, wo[...], preferred_element_type=jnp.float32) + bo[...]
        )  # (Bp, 1)

    return kernel


# ------------------------------- wrapper -------------------------------------


def _full_spec(shape):
    nd = len(shape)
    return pl.BlockSpec(shape, lambda i, _nd=nd: (0,) * _nd)


def _scale_ifo_cols(arr, H):
    """Pre-scale the i/f/o gate column blocks by 0.5 (g stays unscaled).

    One-time parameter transform (folds the tanh half-angle pre-scale into
    the weights/bias so no per-step VALU mul sits on the recurrent path).
    """
    lane = jnp.arange(4 * H)
    is_g = (lane >= 2 * H) & (lane < 3 * H)
    scale = jnp.where(is_g, 1.0, 0.5).astype(jnp.float32)
    return arr * scale            # broadcasts over leading dims


def lstm_regressor_forward(x, params):
    """x: (B, T, input_size), batch_first — same as the PyTorch module."""
    B, T, D = x.shape
    lstm_params = params["lstm"]
    head_params = params["head"]
    H = lstm_params[0][1].shape[0]
    num_layers = len(lstm_params)

    # Pad batch to a full sublane group (multiple of 8 rows).
    Bp = max(8, -(-B // 8) * 8)
    x_tm = jnp.transpose(x, (1, 0, 2)).astype(jnp.float32)        # (T, B, D)
    if Bp != B:
        x_tm = jnp.pad(x_tm, ((0, 0), (0, Bp - B), (0, 0)))
    x_flat = x_tm.reshape(T * Bp, D)                              # time-major rows

    operands = [x_flat]
    # Layer 0: separate W_ih / W_hh (input projection is hoisted over all T).
    wih0, whh0, b0 = lstm_params[0]
    operands += [_scale_ifo_cols(wih0, H), _scale_ifo_cols(whh0, H),
                 _scale_ifo_cols(b0, H)]
    # Layers >= 1: stacked [W_ih; W_hh] for the fused per-step matmul.
    for (wih, whh, b) in lstm_params[1:]:
        w_stk = jnp.concatenate([wih, whh], axis=0)               # (2H, 4H)
        operands += [_scale_ifo_cols(w_stk, H), _scale_ifo_cols(b, H)]
    operands += list(head_params)

    kernel = make_fused_kernel(T, Bp, H, num_layers)
    out = pl.pallas_call(
        kernel,
        out_shape=jax.ShapeDtypeStruct((Bp, 1), jnp.float32),
        grid=(1,),
        in_specs=[_full_spec(a.shape) for a in operands],
        out_specs=_full_spec((Bp, 1)),
        compiler_params=pltpu.CompilerParams(
            dimension_semantics=("arbitrary",)),
    )(*operands)
    return out[:B, 0]                                             # squeeze(-1) -> (B,)


# ------------------------- parameter construction ----------------------------


def init_params(key, input_size, hidden_size, num_layers):
    H = hidden_size
    k = 1.0 / jnp.sqrt(jnp.float32(H))
    lstm_params = []
    for layer in range(num_layers):
        d_in = input_size if layer == 0 else H
        key, k1, k2, k3, k4 = jax.random.split(key, 5)
        w_ih = jax.random.uniform(k1, (4 * H, d_in), jnp.float32, -k, k)
        w_hh = jax.random.uniform(k2, (4 * H, H), jnp.float32, -k, k)
        b_ih = jax.random.uniform(k3, (4 * H,), jnp.float32, -k, k)
        b_hh = jax.random.uniform(k4, (4 * H,), jnp.float32, -k, k)
        lstm_params.append(
            (w_ih.T, w_hh.T, (b_ih + b_hh).reshape(1, 4 * H))
        )

    def linear(key, out_f, in_f):
        kk = 1.0 / jnp.sqrt(jnp.float32(in_f))
        key, kw, kb = jax.random.split(key, 3)
        w = jax.random.uniform(kw, (out_f, in_f), jnp.float32, -kk, kk)
        b = jax.random.uniform(kb, (out_f,), jnp.float32, -kk, kk)
        return key, w.T, b.reshape(1, out_f)

    key, w1, b1 = linear(key, H, H)
    key, w2, b2 = linear(key, H, H)
    key, w3, b3 = linear(key, H, H)
    key, wo, bo = linear(key, 1, H)
    return {"lstm": lstm_params, "head": (w1, b1, w2, b2, w3, b3, wo, bo)}


# ------------------------- pure-JAX reference (check) -------------------------


def reference_forward(x, params):
    h_seq = jnp.transpose(x, (1, 0, 2)).astype(jnp.float32)
    for (wih_t, whh_t, b) in params["lstm"]:
        T, B, _ = h_seq.shape
        H = whh_t.shape[0]
        h = jnp.zeros((B, H), jnp.float32)
        c = jnp.zeros((B, H), jnp.float32)
        outs = []
        for t in range(T):
            gates = h_seq[t] @ wih_t + h @ whh_t + b
            i_g = jax.nn.sigmoid(gates[:, :H])
            f_g = jax.nn.sigmoid(gates[:, H:2 * H])
            g_g = jnp.tanh(gates[:, 2 * H:3 * H])
            o_g = jax.nn.sigmoid(gates[:, 3 * H:])
            c = f_g * c + i_g * g_g
            h = o_g * jnp.tanh(c)
            outs.append(h)
        h_seq = jnp.stack(outs, axis=0)
    h = h_seq[-1]
    w1, b1, w2, b2, w3, b3, wo, bo = params["head"]
    h = jnp.maximum(h @ w1 + b1, 0.0)
    h = jnp.maximum(h @ w2 + b2, 0.0)
    h = jnp.maximum(h @ w3 + b3, 0.0)
    return (h @ wo + bo)[:, 0]


# ------------------------------------ main ------------------------------------

if __name__ == "__main__":
    B, T = 4, 8
    input_size, hidden_size, num_layers = 16, 32, 2

    key = jax.random.PRNGKey(0)
    key, kx = jax.random.split(key)
    x = jax.random.normal(kx, (B, T, input_size), jnp.float32)

    params = init_params(key, input_size, hidden_size, num_layers)

    out = lstm_regressor_forward(x, params)
    out = jax.block_until_ready(out)

    ref = reference_forward(x, params)
    assert out.shape == (B,)
    assert jnp.allclose(out, ref, atol=5e-5, rtol=5e-5), (out, ref)

    print("KERNEL_OK")
</pallas_src>

<mosaic_0001>
module attributes {stable_mosaic.version = 11 : i64} {
  func.func @kernel(%arg0: i32, %arg1: memref<64x16xf32, #tpu.memory_space<vmem>>, %arg2: memref<16x128xf32, #tpu.memory_space<vmem>>, %arg3: memref<32x128xf32, #tpu.memory_space<vmem>>, %arg4: memref<1x128xf32, #tpu.memory_space<vmem>>, %arg5: memref<64x128xf32, #tpu.memory_space<vmem>>, %arg6: memref<1x128xf32, #tpu.memory_space<vmem>>, %arg7: memref<32x32xf32, #tpu.memory_space<vmem>>, %arg8: memref<1x32xf32, #tpu.memory_space<vmem>>, %arg9: memref<32x32xf32, #tpu.memory_space<vmem>>, %arg10: memref<1x32xf32, #tpu.memory_space<vmem>>, %arg11: memref<32x32xf32, #tpu.memory_space<vmem>>, %arg12: memref<1x32xf32, #tpu.memory_space<vmem>>, %arg13: memref<32x1xf32, #tpu.memory_space<vmem>>, %arg14: memref<1x1xf32, #tpu.memory_space<vmem>>, %arg15: memref<8x1xf32, #tpu.memory_space<vmem>>) attributes {dimension_semantics = [#tpu.dimension_semantics<arbitrary>], iteration_bounds = array<i64: 1>, scalar_prefetch = 0 : i64, scratch_operands = 0 : i64, tpu.core_type = #tpu.core_type<tc>, window_params = [{pipeline_mode = #tpu.pipeline_mode<synchronous>, transform_indices = @transform_0, window_bounds = array<i64: 64, 16>}, {pipeline_mode = #tpu.pipeline_mode<synchronous>, transform_indices = @transform_1, window_bounds = array<i64: 16, 128>}, {pipeline_mode = #tpu.pipeline_mode<synchronous>, transform_indices = @transform_2, window_bounds = array<i64: 32, 128>}, {pipeline_mode = #tpu.pipeline_mode<synchronous>, transform_indices = @transform_3, window_bounds = array<i64: 1, 128>}, {pipeline_mode = #tpu.pipeline_mode<synchronous>, transform_indices = @transform_4, window_bounds = array<i64: 64, 128>}, {pipeline_mode = #tpu.pipeline_mode<synchronous>, transform_indices = @transform_5, window_bounds = array<i64: 1, 128>}, {pipeline_mode = #tpu.pipeline_mode<synchronous>, transform_indices = @transform_6, window_bounds = array<i64: 32, 32>}, {pipeline_mode = #tpu.pipeline_mode<synchronous>, transform_indices = @transform_7, window_bounds = array<i64: 1, 32>}, {pipeline_mode = #tpu.pipeline_mode<synchronous>, transform_indices = @transform_8, window_bounds = array<i64: 32, 32>}, {pipeline_mode = #tpu.pipeline_mode<synchronous>, transform_indices = @transform_9, window_bounds = array<i64: 1, 32>}, {pipeline_mode = #tpu.pipeline_mode<synchronous>, transform_indices = @transform_10, window_bounds = array<i64: 32, 32>}, {pipeline_mode = #tpu.pipeline_mode<synchronous>, transform_indices = @transform_11, window_bounds = array<i64: 1, 32>}, {pipeline_mode = #tpu.pipeline_mode<synchronous>, transform_indices = @transform_12, window_bounds = array<i64: 32, 1>}, {pipeline_mode = #tpu.pipeline_mode<synchronous>, transform_indices = @transform_13, window_bounds = array<i64: 1, 1>}, {pipeline_mode = #tpu.pipeline_mode<synchronous>, transform_indices = @transform_14, window_bounds = array<i64: 8, 1>}]} {
    %0 = tpu.iota {dimensions = array<i32: 1>} : vector<8x128xi32>
    %c64_i32 = arith.constant 64 : i32
    %1 = vector.broadcast %c64_i32 : i32 to vector<8x128xi32>
    %2 = arith.cmpi sge, %0, %1 : vector<8x128xi32>
    %c96_i32 = arith.constant 96 : i32
    %3 = vector.broadcast %c96_i32 : i32 to vector<8x128xi32>
    %4 = arith.cmpi slt, %0, %3 : vector<8x128xi32>
    %5 = arith.andi %2, %4 : vector<8x128xi1>
    %cst = arith.constant 1.000000e+00 : f32
    %cst_0 = arith.constant 5.000000e-01 : f32
    %6 = vector.broadcast %cst : f32 to vector<8x128xf32>
    %7 = vector.broadcast %cst_0 : f32 to vector<8x128xf32>
    %8 = arith.select %5, %6, %7 : vector<8x128xi1>, vector<8x128xf32>
    %cst_1 = arith.constant 0.000000e+00 : f32
    %cst_2 = arith.constant 5.000000e-01 : f32
    %9 = vector.broadcast %cst_1 : f32 to vector<8x128xf32>
    %10 = vector.broadcast %cst_2 : f32 to vector<8x128xf32>
    %11 = arith.select %5, %9, %10 : vector<8x128xi1>, vector<8x128xf32>
    %c0 = arith.constant 0 : index
    %c0_3 = arith.constant 0 : index
    %12 = vector.load %arg1[%c0, %c0_3] : memref<64x16xf32, #tpu.memory_space<vmem>>, vector<64x16xf32>
    %c0_4 = arith.constant 0 : index
    %c0_5 = arith.constant 0 : index
    %13 = vector.load %arg2[%c0_4, %c0_5] : memref<16x128xf32, #tpu.memory_space<vmem>>, vector<16x128xf32>
    %cst_6 = arith.constant dense<0.000000e+00> : vector<64x128xf32>
    %14 = tpu.matmul %12, %13, %cst_6 {dimension_numbers = #tpu.dot_dimension_numbers<[1], [0], [0], [1], [0, 0, 1, 1], [], []>} : vector<64x16xf32>, vector<16x128xf32>, vector<64x128xf32> -> vector<64x128xf32>
    %c0_7 = arith.constant 0 : index
    %c0_8 = arith.constant 0 : index
    %15 = vector.load %arg4[%c0_7, %c0_8] : memref<1x128xf32, #tpu.memory_space<vmem>>, vector<1x128xf32>
    %16 = vector.broadcast %15 : vector<1x128xf32> to vector<64x128xf32>
    %17 = arith.addf %14, %16 : vector<64x128xf32>
    %c0_9 = arith.constant 0 : index
    %c0_10 = arith.constant 0 : index
    %18 = vector.load %arg3[%c0_9, %c0_10] : memref<32x128xf32, #tpu.memory_space<vmem>>, vector<32x128xf32>
    %c0_11 = arith.constant 0 : index
    %c0_12 = arith.constant 0 : index
    %19 = vector.load %arg5[%c0_11, %c0_12] : memref<64x128xf32, #tpu.memory_space<vmem>>, vector<64x128xf32>
    %c0_13 = arith.constant 0 : index
    %c0_14 = arith.constant 0 : index
    %20 = vector.load %arg6[%c0_13, %c0_14] : memref<1x128xf32, #tpu.memory_space<vmem>>, vector<1x128xf32>
    %21 = vector.shape_cast %20 : vector<1x128xf32> to vector<1x128xf32>
    %22 = vector.broadcast %21 : vector<1x128xf32> to vector<8x128xf32>
    %cst_15 = arith.constant 0.000000e+00 : f32
    %23 = vector.broadcast %cst_15 : f32 to vector<8x32xf32>
    %24 = vector.extract_strided_slice %17 {offsets = [0, 0], sizes = [8, 128], strides = [1, 1]} : vector<64x128xf32> to vector<8x128xf32>
    %cst_16 = arith.constant dense<0.000000e+00> : vector<8x128xf32>
    %25 = tpu.matmul %23, %18, %cst_16 {dimension_numbers = #tpu.dot_dimension_numbers<[1], [0], [0], [1], [0, 0, 1, 1], [], []>} : vector<8x32xf32>, vector<32x128xf32>, vector<8x128xf32> -> vector<8x128xf32>
    %26 = arith.addf %24, %25 : vector<8x128xf32>
    %27 = math.tanh %26 : vector<8x128xf32>
    %28 = arith.mulf %27, %8 : vector<8x128xf32>
    %29 = arith.addf %28, %11 : vector<8x128xf32>
    %30 = vector.extract_strided_slice %29 {offsets = [0, 0], sizes = [8, 32], strides = [1, 1]} : vector<8x128xf32> to vector<8x32xf32>
    %31 = vector.extract_strided_slice %29 {offsets = [0, 32], sizes = [8, 32], strides = [1, 1]} : vector<8x128xf32> to vector<8x32xf32>
    %32 = vector.extract_strided_slice %29 {offsets = [0, 64], sizes = [8, 32], strides = [1, 1]} : vector<8x128xf32> to vector<8x32xf32>
    %33 = vector.extract_strided_slice %29 {offsets = [0, 96], sizes = [8, 32], strides = [1, 1]} : vector<8x128xf32> to vector<8x32xf32>
    %34 = arith.mulf %31, %23 : vector<8x32xf32>
    %35 = arith.mulf %30, %32 : vector<8x32xf32>
    %36 = arith.addf %34, %35 : vector<8x32xf32>
    %37 = math.tanh %36 : vector<8x32xf32>
    %38 = arith.mulf %33, %37 : vector<8x32xf32>
    %39 = vector.extract_strided_slice %17 {offsets = [8, 0], sizes = [8, 128], strides = [1, 1]} : vector<64x128xf32> to vector<8x128xf32>
    %cst_17 = arith.constant dense<0.000000e+00> : vector<8x128xf32>
    %40 = tpu.matmul %38, %18, %cst_17 {dimension_numbers = #tpu.dot_dimension_numbers<[1], [0], [0], [1], [0, 0, 1, 1], [], []>} : vector<8x32xf32>, vector<32x128xf32>, vector<8x128xf32> -> vector<8x128xf32>
    %41 = arith.addf %39, %40 : vector<8x128xf32>
    %42 = math.tanh %41 : vector<8x128xf32>
    %43 = arith.mulf %42, %8 : vector<8x128xf32>
    %44 = arith.addf %43, %11 : vector<8x128xf32>
    %45 = vector.extract_strided_slice %44 {offsets = [0, 0], sizes = [8, 32], strides = [1, 1]} : vector<8x128xf32> to vector<8x32xf32>
    %46 = vector.extract_strided_slice %44 {offsets = [0, 32], sizes = [8, 32], strides = [1, 1]} : vector<8x128xf32> to vector<8x32xf32>
    %47 = vector.extract_strided_slice %44 {offsets = [0, 64], sizes = [8, 32], strides = [1, 1]} : vector<8x128xf32> to vector<8x32xf32>
    %48 = vector.extract_strided_slice %44 {offsets = [0, 96], sizes = [8, 32], strides = [1, 1]} : vector<8x128xf32> to vector<8x32xf32>
    %49 = arith.mulf %46, %36 : vector<8x32xf32>
    %50 = arith.mulf %45, %47 : vector<8x32xf32>
    %51 = arith.addf %49, %50 : vector<8x32xf32>
    %52 = math.tanh %51 : vector<8x32xf32>
    %53 = arith.mulf %48, %52 : vector<8x32xf32>
    %54 = tpu.concatenate %38, %23 in 1 : vector<8x32xf32>, vector<8x32xf32> -> vector<8x64xf32>
    %cst_18 = arith.constant dense<0.000000e+00> : vector<8x128xf32>
    %55 = tpu.matmul %54, %19, %cst_18 {dimension_numbers = #tpu.dot_dimension_numbers<[1], [0], [0], [1], [0, 0, 1, 1], [], []>} : vector<8x64xf32>, vector<64x128xf32>, vector<8x128xf32> -> vector<8x128xf32>
    %56 = arith.addf %55, %22 : vector<8x128xf32>
    %57 = math.tanh %56 : vector<8x128xf32>
    %58 = arith.mulf %57, %8 : vector<8x128xf32>
    %59 = arith.addf %58, %11 : vector<8x128xf32>
    %60 = vector.extract_strided_slice %59 {offsets = [0, 0], sizes = [8, 32], strides = [1, 1]} : vector<8x128xf32> to vector<8x32xf32>
    %61 = vector.extract_strided_slice %59 {offsets = [0, 32], sizes = [8, 32], strides = [1, 1]} : vector<8x128xf32> to vector<8x32xf32>
    %62 = vector.extract_strided_slice %59 {offsets = [0, 64], sizes = [8, 32], strides = [1, 1]} : vector<8x128xf32> to vector<8x32xf32>
    %63 = vector.extract_strided_slice %59 {offsets = [0, 96], sizes = [8, 32], strides = [1, 1]} : vector<8x128xf32> to vector<8x32xf32>
    %64 = arith.mulf %61, %23 : vector<8x32xf32>
    %65 = arith.mulf %60, %62 : vector<8x32xf32>
    %66 = arith.addf %64, %65 : vector<8x32xf32>
    %67 = math.tanh %66 : vector<8x32xf32>
    %68 = arith.mulf %63, %67 : vector<8x32xf32>
    %69 = vector.extract_strided_slice %17 {offsets = [16, 0], sizes = [8, 128], strides = [1, 1]} : vector<64x128xf32> to vector<8x128xf32>
    %cst_19 = arith.constant dense<0.000000e+00> : vector<8x128xf32>
    %70 = tpu.matmul %53, %18, %cst_19 {dimension_numbers = #tpu.dot_dimension_numbers<[1], [0], [0], [1], [0, 0, 1, 1], [], []>} : vector<8x32xf32>, vector<32x128xf32>, vector<8x128xf32> -> vector<8x128xf32>
    %71 = arith.addf %69, %70 : vector<8x128xf32>
    %72 = math.tanh %71 : vector<8x128xf32>
    %73 = arith.mulf %72, %8 : vector<8x128xf32>
    %74 = arith.addf %73, %11 : vector<8x128xf32>
    %75 = vector.extract_strided_slice %74 {offsets = [0, 0], sizes = [8, 32], strides = [1, 1]} : vector<8x128xf32> to vector<8x32xf32>
    %76 = vector.extract_strided_slice %74 {offsets = [0, 32], sizes = [8, 32], strides = [1, 1]} : vector<8x128xf32> to vector<8x32xf32>
    %77 = vector.extract_strided_slice %74 {offsets = [0, 64], sizes = [8, 32], strides = [1, 1]} : vector<8x128xf32> to vector<8x32xf32>
    %78 = vector.extract_strided_slice %74 {offsets = [0, 96], sizes = [8, 32], strides = [1, 1]} : vector<8x128xf32> to vector<8x32xf32>
    %79 = arith.mulf %76, %51 : vector<8x32xf32>
    %80 = arith.mulf %75, %77 : vector<8x32xf32>
    %81 = arith.addf %79, %80 : vector<8x32xf32>
    %82 = math.tanh %81 : vector<8x32xf32>
    %83 = arith.mulf %78, %82 : vector<8x32xf32>
    %84 = tpu.concatenate %53, %68 in 1 : vector<8x32xf32>, vector<8x32xf32> -> vector<8x64xf32>
    %cst_20 = arith.constant dense<0.000000e+00> : vector<8x128xf32>
    %85 = tpu.matmul %84, %19, %cst_20 {dimension_numbers = #tpu.dot_dimension_numbers<[1], [0], [0], [1], [0, 0, 1, 1], [], []>} : vector<8x64xf32>, vector<64x128xf32>, vector<8x128xf32> -> vector<8x128xf32>
    %86 = arith.addf %85, %22 : vector<8x128xf32>
    %87 = math.tanh %86 : vector<8x128xf32>
    %88 = arith.mulf %87, %8 : vector<8x128xf32>
    %89 = arith.addf %88, %11 : vector<8x128xf32>
    %90 = vector.extract_strided_slice %89 {offsets = [0, 0], sizes = [8, 32], strides = [1, 1]} : vector<8x128xf32> to vector<8x32xf32>
    %91 = vector.extract_strided_slice %89 {offsets = [0, 32], sizes = [8, 32], strides = [1, 1]} : vector<8x128xf32> to vector<8x32xf32>
    %92 = vector.extract_strided_slice %89 {offsets = [0, 64], sizes = [8, 32], strides = [1, 1]} : vector<8x128xf32> to vector<8x32xf32>
    %93 = vector.extract_strided_slice %89 {offsets = [0, 96], sizes = [8, 32], strides = [1, 1]} : vector<8x128xf32> to vector<8x32xf32>
    %94 = arith.mulf %91, %66 : vector<8x32xf32>
    %95 = arith.mulf %90, %92 : vector<8x32xf32>
    %96 = arith.addf %94, %95 : vector<8x32xf32>
    %97 = math.tanh %96 : vector<8x32xf32>
    %98 = arith.mulf %93, %97 : vector<8x32xf32>
    %99 = vector.extract_strided_slice %17 {offsets = [24, 0], sizes = [8, 128], strides = [1, 1]} : vector<64x128xf32> to vector<8x128xf32>
    %cst_21 = arith.constant dense<0.000000e+00> : vector<8x128xf32>
    %100 = tpu.matmul %83, %18, %cst_21 {dimension_numbers = #tpu.dot_dimension_numbers<[1], [0], [0], [1], [0, 0, 1, 1], [], []>} : vector<8x32xf32>, vector<32x128xf32>, vector<8x128xf32> -> vector<8x128xf32>
    %101 = arith.addf %99, %100 : vector<8x128xf32>
    %102 = math.tanh %101 : vector<8x128xf32>
    %103 = arith.mulf %102, %8 : vector<8x128xf32>
    %104 = arith.addf %103, %11 : vector<8x128xf32>
    %105 = vector.extract_strided_slice %104 {offsets = [0, 0], sizes = [8, 32], strides = [1, 1]} : vector<8x128xf32> to vector<8x32xf32>
    %106 = vector.extract_strided_slice %104 {offsets = [0, 32], sizes = [8, 32], strides = [1, 1]} : vector<8x128xf32> to vector<8x32xf32>
    %107 = vector.extract_strided_slice %104 {offsets = [0, 64], sizes = [8, 32], strides = [1, 1]} : vector<8x128xf32> to vector<8x32xf32>
    %108 = vector.extract_strided_slice %104 {offsets = [0, 96], sizes = [8, 32], strides = [1, 1]} : vector<8x128xf32> to vector<8x32xf32>
    %109 = arith.mulf %106, %81 : vector<8x32xf32>
    %110 = arith.mulf %105, %107 : vector<8x32xf32>
    %111 = arith.addf %109, %110 : vector<8x32xf32>
    %112 = math.tanh %111 : vector<8x32xf32>
    %113 = arith.mulf %108, %112 : vector<8x32xf32>
    %114 = tpu.concatenate %83, %98 in 1 : vector<8x32xf32>, vector<8x32xf32> -> vector<8x64xf32>
    %cst_22 = arith.constant dense<0.000000e+00> : vector<8x128xf32>
    %115 = tpu.matmul %114, %19, %cst_22 {dimension_numbers = #tpu.dot_dimension_numbers<[1], [0], [0], [1], [0, 0, 1, 1], [], []>} : vector<8x64xf32>, vector<64x128xf32>, vector<8x128xf32> -> vector<8x128xf32>
    %116 = arith.addf %115, %22 : vector<8x128xf32>
    %117 = math.tanh %116 : vector<8x128xf32>
    %118 = arith.mulf %117, %8 : vector<8x128xf32>
    %119 = arith.addf %118, %11 : vector<8x128xf32>
    %120 = vector.extract_strided_slice %119 {offsets = [0, 0], sizes = [8, 32], strides = [1, 1]} : vector<8x128xf32> to vector<8x32xf32>
    %121 = vector.extract_strided_slice %119 {offsets = [0, 32], sizes = [8, 32], strides = [1, 1]} : vector<8x128xf32> to vector<8x32xf32>
    %122 = vector.extract_strided_slice %119 {offsets = [0, 64], sizes = [8, 32], strides = [1, 1]} : vector<8x128xf32> to vector<8x32xf32>
    %123 = vector.extract_strided_slice %119 {offsets = [0, 96], sizes = [8, 32], strides = [1, 1]} : vector<8x128xf32> to vector<8x32xf32>
    %124 = arith.mulf %121, %96 : vector<8x32xf32>
    %125 = arith.mulf %120, %122 : vector<8x32xf32>
    %126 = arith.addf %124, %125 : vector<8x32xf32>
    %127 = math.tanh %126 : vector<8x32xf32>
    %128 = arith.mulf %123, %127 : vector<8x32xf32>
    %129 = vector.extract_strided_slice %17 {offsets = [32, 0], sizes = [8, 128], strides = [1, 1]} : vector<64x128xf32> to vector<8x128xf32>
    %cst_23 = arith.constant dense<0.000000e+00> : vector<8x128xf32>
    %130 = tpu.matmul %113, %18, %cst_23 {dimension_numbers = #tpu.dot_dimension_numbers<[1], [0], [0], [1], [0, 0, 1, 1], [], []>} : vector<8x32xf32>, vector<32x128xf32>, vector<8x128xf32> -> vector<8x128xf32>
    %131 = arith.addf %129, %130 : vector<8x128xf32>
    %132 = math.tanh %131 : vector<8x128xf32>
    %133 = arith.mulf %132, %8 : vector<8x128xf32>
    %134 = arith.addf %133, %11 : vector<8x128xf32>
    %135 = vector.extract_strided_slice %134 {offsets = [0, 0], sizes = [8, 32], strides = [1, 1]} : vector<8x128xf32> to vector<8x32xf32>
    %136 = vector.extract_strided_slice %134 {offsets = [0, 32], sizes = [8, 32], strides = [1, 1]} : vector<8x128xf32> to vector<8x32xf32>
    %137 = vector.extract_strided_slice %134 {offsets = [0, 64], sizes = [8, 32], strides = [1, 1]} : vector<8x128xf32> to vector<8x32xf32>
    %138 = vector.extract_strided_slice %134 {offsets = [0, 96], sizes = [8, 32], strides = [1, 1]} : vector<8x128xf32> to vector<8x32xf32>
    %139 = arith.mulf %136, %111 : vector<8x32xf32>
    %140 = arith.mulf %135, %137 : vector<8x32xf32>
    %141 = arith.addf %139, %140 : vector<8x32xf32>
    %142 = math.tanh %141 : vector<8x32xf32>
    %143 = arith.mulf %138, %142 : vector<8x32xf32>
    %144 = tpu.concatenate %113, %128 in 1 : vector<8x32xf32>, vector<8x32xf32> -> vector<8x64xf32>
    %cst_24 = arith.constant dense<0.000000e+00> : vector<8x128xf32>
    %145 = tpu.matmul %144, %19, %cst_24 {dimension_numbers = #tpu.dot_dimension_numbers<[1], [0], [0], [1], [0, 0, 1, 1], [], []>} : vector<8x64xf32>, vector<64x128xf32>, vector<8x128xf32> -> vector<8x128xf32>
    %146 = arith.addf %145, %22 : vector<8x128xf32>
    %147 = math.tanh %146 : vector<8x128xf32>
    %148 = arith.mulf %147, %8 : vector<8x128xf32>
    %149 = arith.addf %148, %11 : vector<8x128xf32>
    %150 = vector.extract_strided_slice %149 {offsets = [0, 0], sizes = [8, 32], strides = [1, 1]} : vector<8x128xf32> to vector<8x32xf32>
    %151 = vector.extract_strided_slice %149 {offsets = [0, 32], sizes = [8, 32], strides = [1, 1]} : vector<8x128xf32> to vector<8x32xf32>
    %152 = vector.extract_strided_slice %149 {offsets = [0, 64], sizes = [8, 32], strides = [1, 1]} : vector<8x128xf32> to vector<8x32xf32>
    %153 = vector.extract_strided_slice %149 {offsets = [0, 96], sizes = [8, 32], strides = [1, 1]} : vector<8x128xf32> to vector<8x32xf32>
    %154 = arith.mulf %151, %126 : vector<8x32xf32>
    %155 = arith.mulf %150, %152 : vector<8x32xf32>
    %156 = arith.addf %154, %155 : vector<8x32xf32>
    %157 = math.tanh %156 : vector<8x32xf32>
    %158 = arith.mulf %153, %157 : vector<8x32xf32>
    %159 = vector.extract_strided_slice %17 {offsets = [40, 0], sizes = [8, 128], strides = [1, 1]} : vector<64x128xf32> to vector<8x128xf32>
    %cst_25 = arith.constant dense<0.000000e+00> : vector<8x128xf32>
    %160 = tpu.matmul %143, %18, %cst_25 {dimension_numbers = #tpu.dot_dimension_numbers<[1], [0], [0], [1], [0, 0, 1, 1], [], []>} : vector<8x32xf32>, vector<32x128xf32>, vector<8x128xf32> -> vector<8x128xf32>
    %161 = arith.addf %159, %160 : vector<8x128xf32>
    %162 = math.tanh %161 : vector<8x128xf32>
    %163 = arith.mulf %162, %8 : vector<8x128xf32>
    %164 = arith.addf %163, %11 : vector<8x128xf32>
    %165 = vector.extract_strided_slice %164 {offsets = [0, 0], sizes = [8, 32], strides = [1, 1]} : vector<8x128xf32> to vector<8x32xf32>
    %166 = vector.extract_strided_slice %164 {offsets = [0, 32], sizes = [8, 32], strides = [1, 1]} : vector<8x128xf32> to vector<8x32xf32>
    %167 = vector.extract_strided_slice %164 {offsets = [0, 64], sizes = [8, 32], strides = [1, 1]} : vector<8x128xf32> to vector<8x32xf32>
    %168 = vector.extract_strided_slice %164 {offsets = [0, 96], sizes = [8, 32], strides = [1, 1]} : vector<8x128xf32> to vector<8x32xf32>
    %169 = arith.mulf %166, %141 : vector<8x32xf32>
    %170 = arith.mulf %165, %167 : vector<8x32xf32>
    %171 = arith.addf %169, %170 : vector<8x32xf32>
    %172 = math.tanh %171 : vector<8x32xf32>
    %173 = arith.mulf %168, %172 : vector<8x32xf32>
    %174 = tpu.concatenate %143, %158 in 1 : vector<8x32xf32>, vector<8x32xf32> -> vector<8x64xf32>
    %cst_26 = arith.constant dense<0.000000e+00> : vector<8x128xf32>
    %175 = tpu.matmul %174, %19, %cst_26 {dimension_numbers = #tpu.dot_dimension_numbers<[1], [0], [0], [1], [0, 0, 1, 1], [], []>} : vector<8x64xf32>, vector<64x128xf32>, vector<8x128xf32> -> vector<8x128xf32>
    %176 = arith.addf %175, %22 : vector<8x128xf32>
    %177 = math.tanh %176 : vector<8x128xf32>
    %178 = arith.mulf %177, %8 : vector<8x128xf32>
    %179 = arith.addf %178, %11 : vector<8x128xf32>
    %180 = vector.extract_strided_slice %179 {offsets = [0, 0], sizes = [8, 32], strides = [1, 1]} : vector<8x128xf32> to vector<8x32xf32>
    %181 = vector.extract_strided_slice %179 {offsets = [0, 32], sizes = [8, 32], strides = [1, 1]} : vector<8x128xf32> to vector<8x32xf32>
    %182 = vector.extract_strided_slice %179 {offsets = [0, 64], sizes = [8, 32], strides = [1, 1]} : vector<8x128xf32> to vector<8x32xf32>
    %183 = vector.extract_strided_slice %179 {offsets = [0, 96], sizes = [8, 32], strides = [1, 1]} : vector<8x128xf32> to vector<8x32xf32>
    %184 = arith.mulf %181, %156 : vector<8x32xf32>
    %185 = arith.mulf %180, %182 : vector<8x32xf32>
    %186 = arith.addf %184, %185 : vector<8x32xf32>
    %187 = math.tanh %186 : vector<8x32xf32>
    %188 = arith.mulf %183, %187 : vector<8x32xf32>
    %189 = vector.extract_strided_slice %17 {offsets = [48, 0], sizes = [8, 128], strides = [1, 1]} : vector<64x128xf32> to vector<8x128xf32>
    %cst_27 = arith.constant dense<0.000000e+00> : vector<8x128xf32>
    %190 = tpu.matmul %173, %18, %cst_27 {dimension_numbers = #tpu.dot_dimension_numbers<[1], [0], [0], [1], [0, 0, 1, 1], [], []>} : vector<8x32xf32>, vector<32x128xf32>, vector<8x128xf32> -> vector<8x128xf32>
    %191 = arith.addf %189, %190 : vector<8x128xf32>
    %192 = math.tanh %191 : vector<8x128xf32>
    %193 = arith.mulf %192, %8 : vector<8x128xf32>
    %194 = arith.addf %193, %11 : vector<8x128xf32>
    %195 = vector.extract_strided_slice %194 {offsets = [0, 0], sizes = [8, 32], strides = [1, 1]} : vector<8x128xf32> to vector<8x32xf32>
    %196 = vector.extract_strided_slice %194 {offsets = [0, 32], sizes = [8, 32], strides = [1, 1]} : vector<8x128xf32> to vector<8x32xf32>
    %197 = vector.extract_strided_slice %194 {offsets = [0, 64], sizes = [8, 32], strides = [1, 1]} : vector<8x128xf32> to vector<8x32xf32>
    %198 = vector.extract_strided_slice %194 {offsets = [0, 96], sizes = [8, 32], strides = [1, 1]} : vector<8x128xf32> to vector<8x32xf32>
    %199 = arith.mulf %196, %171 : vector<8x32xf32>
    %200 = arith.mulf %195, %197 : vector<8x32xf32>
    %201 = arith.addf %199, %200 : vector<8x32xf32>
    %202 = math.tanh %201 : vector<8x32xf32>
    %203 = arith.mulf %198, %202 : vector<8x32xf32>
    %204 = tpu.concatenate %173, %188 in 1 : vector<8x32xf32>, vector<8x32xf32> -> vector<8x64xf32>
    %cst_28 = arith.constant dense<0.000000e+00> : vector<8x128xf32>
    %205 = tpu.matmul %204, %19, %cst_28 {dimension_numbers = #tpu.dot_dimension_numbers<[1], [0], [0], [1], [0, 0, 1, 1], [], []>} : vector<8x64xf32>, vector<64x128xf32>, vector<8x128xf32> -> vector<8x128xf32>
    %206 = arith.addf %205, %22 : vector<8x128xf32>
    %207 = math.tanh %206 : vector<8x128xf32>
    %208 = arith.mulf %207, %8 : vector<8x128xf32>
    %209 = arith.addf %208, %11 : vector<8x128xf32>
    %210 = vector.extract_strided_slice %209 {offsets = [0, 0], sizes = [8, 32], strides = [1, 1]} : vector<8x128xf32> to vector<8x32xf32>
    %211 = vector.extract_strided_slice %209 {offsets = [0, 32], sizes = [8, 32], strides = [1, 1]} : vector<8x128xf32> to vector<8x32xf32>
    %212 = vector.extract_strided_slice %209 {offsets = [0, 64], sizes = [8, 32], strides = [1, 1]} : vector<8x128xf32> to vector<8x32xf32>
    %213 = vector.extract_strided_slice %209 {offsets = [0, 96], sizes = [8, 32], strides = [1, 1]} : vector<8x128xf32> to vector<8x32xf32>
    %214 = arith.mulf %211, %186 : vector<8x32xf32>
    %215 = arith.mulf %210, %212 : vector<8x32xf32>
    %216 = arith.addf %214, %215 : vector<8x32xf32>
    %217 = math.tanh %216 : vector<8x32xf32>
    %218 = arith.mulf %213, %217 : vector<8x32xf32>
    %219 = vector.extract_strided_slice %17 {offsets = [56, 0], sizes = [8, 128], strides = [1, 1]} : vector<64x128xf32> to vector<8x128xf32>
    %cst_29 = arith.constant dense<0.000000e+00> : vector<8x128xf32>
    %220 = tpu.matmul %203, %18, %cst_29 {dimension_numbers = #tpu.dot_dimension_numbers<[1], [0], [0], [1], [0, 0, 1, 1], [], []>} : vector<8x32xf32>, vector<32x128xf32>, vector<8x128xf32> -> vector<8x128xf32>
    %221 = arith.addf %219, %220 : vector<8x128xf32>
    %222 = math.tanh %221 : vector<8x128xf32>
    %223 = arith.mulf %222, %8 : vector<8x128xf32>
    %224 = arith.addf %223, %11 : vector<8x128xf32>
    %225 = vector.extract_strided_slice %224 {offsets = [0, 0], sizes = [8, 32], strides = [1, 1]} : vector<8x128xf32> to vector<8x32xf32>
    %226 = vector.extract_strided_slice %224 {offsets = [0, 32], sizes = [8, 32], strides = [1, 1]} : vector<8x128xf32> to vector<8x32xf32>
    %227 = vector.extract_strided_slice %224 {offsets = [0, 64], sizes = [8, 32], strides = [1, 1]} : vector<8x128xf32> to vector<8x32xf32>
    %228 = vector.extract_strided_slice %224 {offsets = [0, 96], sizes = [8, 32], strides = [1, 1]} : vector<8x128xf32> to vector<8x32xf32>
    %229 = arith.mulf %226, %201 : vector<8x32xf32>
    %230 = arith.mulf %225, %227 : vector<8x32xf32>
    %231 = arith.addf %229, %230 : vector<8x32xf32>
    %232 = math.tanh %231 : vector<8x32xf32>
    %233 = arith.mulf %228, %232 : vector<8x32xf32>
    %234 = tpu.concatenate %203, %218 in 1 : vector<8x32xf32>, vector<8x32xf32> -> vector<8x64xf32>
    %cst_30 = arith.constant dense<0.000000e+00> : vector<8x128xf32>
    %235 = tpu.matmul %234, %19, %cst_30 {dimension_numbers = #tpu.dot_dimension_numbers<[1], [0], [0], [1], [0, 0, 1, 1], [], []>} : vector<8x64xf32>, vector<64x128xf32>, vector<8x128xf32> -> vector<8x128xf32>
    %236 = arith.addf %235, %22 : vector<8x128xf32>
    %237 = math.tanh %236 : vector<8x128xf32>
    %238 = arith.mulf %237, %8 : vector<8x128xf32>
    %239 = arith.addf %238, %11 : vector<8x128xf32>
    %240 = vector.extract_strided_slice %239 {offsets = [0, 0], sizes = [8, 32], strides = [1, 1]} : vector<8x128xf32> to vector<8x32xf32>
    %241 = vector.extract_strided_slice %239 {offsets = [0, 32], sizes = [8, 32], strides = [1, 1]} : vector<8x128xf32> to vector<8x32xf32>
    %242 = vector.extract_strided_slice %239 {offsets = [0, 64], sizes = [8, 32], strides = [1, 1]} : vector<8x128xf32> to vector<8x32xf32>
    %243 = vector.extract_strided_slice %239 {offsets = [0, 96], sizes = [8, 32], strides = [1, 1]} : vector<8x128xf32> to vector<8x32xf32>
    %244 = arith.mulf %241, %216 : vector<8x32xf32>
    %245 = arith.mulf %240, %242 : vector<8x32xf32>
    %246 = arith.addf %244, %245 : vector<8x32xf32>
    %247 = math.tanh %246 : vector<8x32xf32>
    %248 = arith.mulf %243, %247 : vector<8x32xf32>
    %249 = tpu.concatenate %233, %248 in 1 : vector<8x32xf32>, vector<8x32xf32> -> vector<8x64xf32>
    %cst_31 = arith.constant dense<0.000000e+00> : vector<8x128xf32>
    %250 = tpu.matmul %249, %19, %cst_31 {dimension_numbers = #tpu.dot_dimension_numbers<[1], [0], [0], [1], [0, 0, 1, 1], [], []>} : vector<8x64xf32>, vector<64x128xf32>, vector<8x128xf32> -> vector<8x128xf32>
    %251 = arith.addf %250, %22 : vector<8x128xf32>
    %252 = math.tanh %251 : vector<8x128xf32>
    %253 = arith.mulf %252, %8 : vector<8x128xf32>
    %254 = arith.addf %253, %11 : vector<8x128xf32>
    %255 = vector.extract_strided_slice %254 {offsets = [0, 0], sizes = [8, 32], strides = [1, 1]} : vector<8x128xf32> to vector<8x32xf32>
    %256 = vector.extract_strided_slice %254 {offsets = [0, 32], sizes = [8, 32], strides = [1, 1]} : vector<8x128xf32> to vector<8x32xf32>
    %257 = vector.extract_strided_slice %254 {offsets = [0, 64], sizes = [8, 32], strides = [1, 1]} : vector<8x128xf32> to vector<8x32xf32>
    %258 = vector.extract_strided_slice %254 {offsets = [0, 96], sizes = [8, 32], strides = [1, 1]} : vector<8x128xf32> to vector<8x32xf32>
    %259 = arith.mulf %256, %246 : vector<8x32xf32>
    %260 = arith.mulf %255, %257 : vector<8x32xf32>
    %261 = arith.addf %259, %260 : vector<8x32xf32>
    %262 = math.tanh %261 : vector<8x32xf32>
    %263 = arith.mulf %258, %262 : vector<8x32xf32>
    %c0_32 = arith.constant 0 : index
    %c0_33 = arith.constant 0 : index
    %264 = vector.load %arg7[%c0_32, %c0_33] : memref<32x32xf32, #tpu.memory_space<vmem>>, vector<32x32xf32>
    %cst_34 = arith.constant dense<0.000000e+00> : vector<8x32xf32>
    %265 = tpu.matmul %263, %264, %cst_34 {dimension_numbers = #tpu.dot_dimension_numbers<[1], [0], [0], [1], [0, 0, 1, 1], [], []>} : vector<8x32xf32>, vector<32x32xf32>, vector<8x32xf32> -> vector<8x32xf32>
    %c0_35 = arith.constant 0 : index
    %c0_36 = arith.constant 0 : index
    %266 = vector.load %arg8[%c0_35, %c0_36] : memref<1x32xf32, #tpu.memory_space<vmem>>, vector<1x32xf32>
    %267 = vector.broadcast %266 : vector<1x32xf32> to vector<8x32xf32>
    %268 = arith.addf %265, %267 : vector<8x32xf32>
    %cst_37 = arith.constant 0.000000e+00 : f32
    %269 = vector.broadcast %cst_37 : f32 to vector<8x32xf32>
    %270 = arith.maximumf %268, %269 : vector<8x32xf32>
    %c0_38 = arith.constant 0 : index
    %c0_39 = arith.constant 0 : index
    %271 = vector.load %arg9[%c0_38, %c0_39] : memref<32x32xf32, #tpu.memory_space<vmem>>, vector<32x32xf32>
    %cst_40 = arith.constant dense<0.000000e+00> : vector<8x32xf32>
    %272 = tpu.matmul %270, %271, %cst_40 {dimension_numbers = #tpu.dot_dimension_numbers<[1], [0], [0], [1], [0, 0, 1, 1], [], []>} : vector<8x32xf32>, vector<32x32xf32>, vector<8x32xf32> -> vector<8x32xf32>
    %c0_41 = arith.constant 0 : index
    %c0_42 = arith.constant 0 : index
    %273 = vector.load %arg10[%c0_41, %c0_42] : memref<1x32xf32, #tpu.memory_space<vmem>>, vector<1x32xf32>
    %274 = vector.broadcast %273 : vector<1x32xf32> to vector<8x32xf32>
    %275 = arith.addf %272, %274 : vector<8x32xf32>
    %cst_43 = arith.constant 0.000000e+00 : f32
    %276 = vector.broadcast %cst_43 : f32 to vector<8x32xf32>
    %277 = arith.maximumf %275, %276 : vector<8x32xf32>
    %c0_44 = arith.constant 0 : index
    %c0_45 = arith.constant 0 : index
    %278 = vector.load %arg11[%c0_44, %c0_45] : memref<32x32xf32, #tpu.memory_space<vmem>>, vector<32x32xf32>
    %cst_46 = arith.constant dense<0.000000e+00> : vector<8x32xf32>
    %279 = tpu.matmul %277, %278, %cst_46 {dimension_numbers = #tpu.dot_dimension_numbers<[1], [0], [0], [1], [0, 0, 1, 1], [], []>} : vector<8x32xf32>, vector<32x32xf32>, vector<8x32xf32> -> vector<8x32xf32>
    %c0_47 = arith.constant 0 : index
    %c0_48 = arith.constant 0 : index
    %280 = vector.load %arg12[%c0_47, %c0_48] : memref<1x32xf32, #tpu.memory_space<vmem>>, vector<1x32xf32>
    %281 = vector.broadcast %280 : vector<1x32xf32> to vector<8x32xf32>
    %282 = arith.addf %279, %281 : vector<8x32xf32>
    %cst_49 = arith.constant 0.000000e+00 : f32
    %283 = vector.broadcast %cst_49 : f32 to vector<8x32xf32>
    %284 = arith.maximumf %282, %283 : vector<8x32xf32>
    %c0_50 = arith.constant 0 : index
    %c0_51 = arith.constant 0 : index
    %285 = vector.load %arg13[%c0_50, %c0_51] : memref<32x1xf32, #tpu.memory_space<vmem>>, vector<32x1xf32>
    %cst_52 = arith.constant dense<0.000000e+00> : vector<8x1xf32>
    %286 = tpu.matmul %284, %285, %cst_52 {dimension_numbers = #tpu.dot_dimension_numbers<[1], [0], [0], [1], [0, 0, 1, 1], [], []>} : vector<8x32xf32>, vector<32x1xf32>, vector<8x1xf32> -> vector<8x1xf32>
    %c0_53 = arith.constant 0 : index
    %c0_54 = arith.constant 0 : index
    %287 = vector.load %arg14[%c0_53, %c0_54] : memref<1x1xf32, #tpu.memory_space<vmem>>, vector<1x1xf32>
    %288 = vector.broadcast %287 : vector<1x1xf32> to vector<8x1xf32>
    %289 = arith.addf %286, %288 : vector<8x1xf32>
    %c0_55 = arith.constant 0 : index
    %c0_56 = arith.constant 0 : index
    %290 = vector.load %arg15[%c0_55, %c0_56] : memref<8x1xf32, #tpu.memory_space<vmem>>, vector<8x1xf32>
    tpu.vector_store %arg15[%c0_55, %c0_56], %289 {strides = array<i32>} : memref<8x1xf32, #tpu.memory_space<vmem>>, vector<8x1xf32>,
    return
  }
  func.func @transform_0(%arg0: i32) -> (i32, i32) {
    %c0_i32 = arith.constant 0 : i32
    %c0_i32_0 = arith.constant 0 : i32
    %c0_i32_1 = arith.constant 0 : i32
    return %c0_i32, %c0_i32_0 : i32, i32
  }
  func.func @transform_1(%arg0: i32) -> (i32, i32) {
    %c0_i32 = arith.constant 0 : i32
    %c0_i32_0 = arith.constant 0 : i32
    %c0_i32_1 = arith.constant 0 : i32
    return %c0_i32, %c0_i32_0 : i32, i32
  }
  func.func @transform_2(%arg0: i32) -> (i32, i32) {
    %c0_i32 = arith.constant 0 : i32
    %c0_i32_0 = arith.constant 0 : i32
    %c0_i32_1 = arith.constant 0 : i32
    return %c0_i32, %c0_i32_0 : i32, i32
  }
  func.func @transform_3(%arg0: i32) -> (i32, i32) {
    %c0_i32 = arith.constant 0 : i32
    %c0_i32_0 = arith.constant 0 : i32
    %c0_i32_1 = arith.constant 0 : i32
    return %c0_i32, %c0_i32_0 : i32, i32
  }
  func.func @transform_4(%arg0: i32) -> (i32, i32) {
    %c0_i32 = arith.constant 0 : i32
    %c0_i32_0 = arith.constant 0 : i32
    %c0_i32_1 = arith.constant 0 : i32
    return %c0_i32, %c0_i32_0 : i32, i32
  }
  func.func @transform_5(%arg0: i32) -> (i32, i32) {
    %c0_i32 = arith.constant 0 : i32
    %c0_i32_0 = arith.constant 0 : i32
    %c0_i32_1 = arith.constant 0 : i32
    return %c0_i32, %c0_i32_0 : i32, i32
  }
  func.func @transform_6(%arg0: i32) -> (i32, i32) {
    %c0_i32 = arith.constant 0 : i32
    %c0_i32_0 = arith.constant 0 : i32
    %c0_i32_1 = arith.constant 0 : i32
    return %c0_i32, %c0_i32_0 : i32, i32
  }
  func.func @transform_7(%arg0: i32) -> (i32, i32) {
    %c0_i32 = arith.constant 0 : i32
    %c0_i32_0 = arith.constant 0 : i32
    %c0_i32_1 = arith.constant 0 : i32
    return %c0_i32, %c0_i32_0 : i32, i32
  }
  func.func @transform_8(%arg0: i32) -> (i32, i32) {
    %c0_i32 = arith.constant 0 : i32
    %c0_i32_0 = arith.constant 0 : i32
    %c0_i32_1 = arith.constant 0 : i32
    return %c0_i32, %c0_i32_0 : i32, i32
  }
  func.func @transform_9(%arg0: i32) -> (i32, i32) {
    %c0_i32 = arith.constant 0 : i32
    %c0_i32_0 = arith.constant 0 : i32
    %c0_i32_1 = arith.constant 0 : i32
    return %c0_i32, %c0_i32_0 : i32, i32
  }
  func.func @transform_10(%arg0: i32) -> (i32, i32) {
    %c0_i32 = arith.constant 0 : i32
    %c0_i32_0 = arith.constant 0 : i32
    %c0_i32_1 = arith.constant 0 : i32
    return %c0_i32, %c0_i32_0 : i32, i32
  }
  func.func @transform_11(%arg0: i32) -> (i32, i32) {
    %c0_i32 = arith.constant 0 : i32
    %c0_i32_0 = arith.constant 0 : i32
    %c0_i32_1 = arith.constant 0 : i32
    return %c0_i32, %c0_i32_0 : i32, i32
  }
  func.func @transform_12(%arg0: i32) -> (i32, i32) {
    %c0_i32 = arith.constant 0 : i32
    %c0_i32_0 = arith.constant 0 : i32
    %c0_i32_1 = arith.constant 0 : i32
    return %c0_i32, %c0_i32_0 : i32, i32
  }
  func.func @transform_13(%arg0: i32) -> (i32, i32) {
    %c0_i32 = arith.constant 0 : i32
    %c0_i32_0 = arith.constant 0 : i32
    %c0_i32_1 = arith.constant 0 : i32
    return %c0_i32, %c0_i32_0 : i32, i32
  }
  func.func @transform_14(%arg0: i32) -> (i32, i32) {
    %c0_i32 = arith.constant 0 : i32
    %c0_i32_0 = arith.constant 0 : i32
    %c0_i32_1 = arith.constant 0 : i32
    return %c0_i32, %c0_i32_0 : i32, i32
  }
}

</mosaic_0001>

<llo_original>
// kernel: tpu_custom_call.1
$region0: #{tpu_custom_call.1}
  #allocation0 [shape = 'u32[]', space=smem, size = 0x4, offset = 0x4, fixed_abs, tag = 'smem constant byte address 0x4 - core index']
  #allocation1 [shape = 'u32[144,128]{1,0:T(1,128)}', space=vmem, size = 0x12000, scoped, tag = 'internal scratch']
  #allocation2 [shape = 'f32[1,1]{1,0:T(1,128)S(1)}', space=vmem, size = 0x200, scoped, tag = 'scoped memory for tpu_custom_call.1']
  %s0 = inlined_call_operand.vmem [shape: f32[64,16], index: 0, kind: input, shape index: {}]
  %s1 = inlined_call_operand.hbm [shape: f32[16,128], index: 1, kind: input, shape index: {}]
  %s2 = inlined_call_operand.vmem [shape: f32[32,128], index: 2, kind: input, shape index: {}]
  %s3 = inlined_call_operand.vmem [shape: f32[1,128], index: 3, kind: input, shape index: {}]
  %s4 = inlined_call_operand.vmem [shape: f32[64,128], index: 4, kind: input, shape index: {}]
  %s5 = inlined_call_operand.hbm [shape: f32[1,128], index: 5, kind: input, shape index: {}]
  %s6 = inlined_call_operand.hbm [shape: f32[32,32], index: 6, kind: input, shape index: {}]
  %s7 = inlined_call_operand.hbm [shape: f32[1,32], index: 7, kind: input, shape index: {}]
  %s8 = inlined_call_operand.vmem [shape: f32[32,32], index: 8, kind: input, shape index: {}]
  %s9 = inlined_call_operand.vmem [shape: f32[1,32], index: 9, kind: input, shape index: {}]
  %s10 = inlined_call_operand.hbm [shape: f32[32,32], index: 10, kind: input, shape index: {}]
  %s11 = inlined_call_operand.vmem [shape: f32[1,32], index: 11, kind: input, shape index: {}]
  %s12 = inlined_call_operand.vmem [shape: f32[32,1], index: 12, kind: input, shape index: {}]
  %s13 = inlined_call_operand.<no memory space> [shape: f32[1,1], index: 13, kind: input, shape index: {}]
  %s14 = inlined_call_operand.vmem [shape: f32[8,1], index: 14, kind: output, shape index: {}]
  %s15 = sld [smem:[#allocation0]]
  $region86: #{tpu_custom_call.1} parent=0
    _
  %s17 = ssub.s32 1, %s15
  %s18 = scalar_select 0, %s17, %s15
  %v19 = vstv %s13
  %20 = vst [vmem:[#allocation2] sm:$0x1] %v19
  $region1: #{tpu_custom_call.1} parent=0
    #allocation3 [shape = 'u8[8192]{0}', space=vmem, size = 0x2000, scoped, tag = 'input window, operand 1, single buffered']
    #allocation4 [shape = 's32[1]{0}', space=sflag, size = 0x4, scoped, tag = 'scoped memory for tpu_custom_call.1']
    #allocation5 [shape = 'u8[512]{0}', space=vmem, size = 0x400, scoped, tag = 'input window, operand 5, single buffered']
    #allocation6 [shape = 's32[1]{0}', space=sflag, size = 0x4, scoped, tag = 'scoped memory for tpu_custom_call.1']
    #allocation7 [shape = 'u8[16384]{0}', space=vmem, size = 0x4000, scoped, tag = 'input window, operand 6, single buffered']
    #allocation8 [shape = 'u8[512]{0}', space=vmem, size = 0x400, scoped, tag = 'input window, operand 7, single buffered']
    #allocation9 [shape = 's32[1]{0}', space=sflag, size = 0x4, scoped, tag = 'scoped memory for tpu_custom_call.1']
    #allocation10 [shape = 'u8[16384]{0}', space=vmem, size = 0x4000, scoped, tag = 'input window, operand 10, single buffered']
    %21 = vsyncpa [#allocation4], 0
    %22 = vsyncpa [#allocation6], 0
    %23 = vsyncpa [#allocation9], 0
    // Predicated region
    $region2: #{tpu_custom_call.1} parent=1 // pred_check
      _
    $region3: #{tpu_custom_call.1} parent=1 // pred_check_branch
      %25 = sbr.rel (0) target = $region5
    $region4: #{tpu_custom_call.1} parent=1 // pred_region
      _
    $region5: #{tpu_custom_call.1} parent=1 // pred_fallthru
      _
    // Predicated region
    $region6: #{tpu_custom_call.1} parent=1 // pred_check
      _
    $region7: #{tpu_custom_call.1} parent=1 // pred_check_branch
      %27 = sbr.rel (0) target = $region9
    $region8: #{tpu_custom_call.1} parent=1 // pred_region
      %s29 = ssub.s32 256, 256
      %30 = vsyncadd [#allocation4], %s29
      %s31 = sshll.u32 [#allocation3], 4
      %s32 = int_to_ptr.vmem [resolvable:$true] %s31
      %37 = dma.hbm_to_vmem [thread:$0]  %s1, 256, %s32, [#allocation4], 128, 128, 8
    $region9: #{tpu_custom_call.1} parent=1 // pred_fallthru
      _
    // Predicated region
    $region10: #{tpu_custom_call.1} parent=1 // pred_check
      _
    $region11: #{tpu_custom_call.1} parent=1 // pred_check_branch
      %39 = sbr.rel (0) target = $region13
    $region12: #{tpu_custom_call.1} parent=1 // pred_region
      _
    $region13: #{tpu_custom_call.1} parent=1 // pred_fallthru
      _
    // Predicated region
    $region14: #{tpu_custom_call.1} parent=1 // pred_check
      _
    $region15: #{tpu_custom_call.1} parent=1 // pred_check_branch
      %41 = sbr.rel (0) target = $region17
    $region16: #{tpu_custom_call.1} parent=1 // pred_region
      _
    $region17: #{tpu_custom_call.1} parent=1 // pred_fallthru
      _
    // Predicated region
    $region18: #{tpu_custom_call.1} parent=1 // pred_check
      _
    $region19: #{tpu_custom_call.1} parent=1 // pred_check_branch
      %43 = sbr.rel (0) target = $region21
    $region20: #{tpu_custom_call.1} parent=1 // pred_region
      _
    $region21: #{tpu_custom_call.1} parent=1 // pred_fallthru
      _
    // Predicated region
    $region22: #{tpu_custom_call.1} parent=1 // pred_check
      _
    $region23: #{tpu_custom_call.1} parent=1 // pred_check_branch
      %45 = sbr.rel (0) target = $region25
    $region24: #{tpu_custom_call.1} parent=1 // pred_region
      %s47 = ssub.s32 16, 16
      %48 = vsyncadd [#allocation6], %s47
      %s50 = sshll.u32 [#allocation5], 4
      %s51 = int_to_ptr.vmem [resolvable:$true] %s50
      %53 = dma.hbm_to_vmem [thread:$0]  %s5, 16, %s51, [#allocation6]
    $region25: #{tpu_custom_call.1} parent=1 // pred_fallthru
      _
    // Predicated region
    $region26: #{tpu_custom_call.1} parent=1 // pred_check
      _
    $region27: #{tpu_custom_call.1} parent=1 // pred_check_branch
      %55 = sbr.rel (0) target = $region29
    $region28: #{tpu_custom_call.1} parent=1 // pred_region
      %s57 = ssub.s32 512, 512
      %58 = vsyncadd [#allocation6], %s57
      %s59 = sshll.u32 [#allocation7], 4
      %s60 = int_to_ptr.vmem [resolvable:$true] %s59
      %65 = dma.hbm_to_vmem [thread:$0]  %s6, 512, %s60, [#allocation6], 128, 128, 8
    $region29: #{tpu_custom_call.1} parent=1 // pred_fallthru
      _
    // Predicated region
    $region30: #{tpu_custom_call.1} parent=1 // pred_check
      _
    $region31: #{tpu_custom_call.1} parent=1 // pred_check_branch
      %67 = sbr.rel (0) target = $region33
    $region32: #{tpu_custom_call.1} parent=1 // pred_region
      %s69 = ssub.s32 16, 16
      %70 = vsyncadd [#allocation9], %s69
      %s72 = sshll.u32 [#allocation8], 4
      %s73 = int_to_ptr.vmem [resolvable:$true] %s72
      %75 = dma.hbm_to_vmem [thread:$0]  %s7, 16, %s73, [#allocation9]
    $region33: #{tpu_custom_call.1} parent=1 // pred_fallthru
      _
    // Predicated region
    $region34: #{tpu_custom_call.1} parent=1 // pred_check
      _
    $region35: #{tpu_custom_call.1} parent=1 // pred_check_branch
      %77 = sbr.rel (0) target = $region37
    $region36: #{tpu_custom_call.1} parent=1 // pred_region
      _
    $region37: #{tpu_custom_call.1} parent=1 // pred_fallthru
      _
    // Predicated region
    $region38: #{tpu_custom_call.1} parent=1 // pred_check
      _
    $region39: #{tpu_custom_call.1} parent=1 // pred_check_branch
      %79 = sbr.rel (0) target = $region41
    $region40: #{tpu_custom_call.1} parent=1 // pred_region
      _
    $region41: #{tpu_custom_call.1} parent=1 // pred_fallthru
      _
    // Predicated region
    $region42: #{tpu_custom_call.1} parent=1 // pred_check
      _
    $region43: #{tpu_custom_call.1} parent=1 // pred_check_branch
      %81 = sbr.rel (0) target = $region45
    $region44: #{tpu_custom_call.1} parent=1 // pred_region
      %s83 = ssub.s32 512, 512
      %84 = vsyncadd [#allocation9], %s83
      %s85 = sshll.u32 [#allocation10], 4
      %s86 = int_to_ptr.vmem [resolvable:$true] %s85
      %91 = dma.hbm_to_vmem [thread:$0]  %s10, 512, %s86, [#allocation9], 128, 128, 8
    $region45: #{tpu_custom_call.1} parent=1 // pred_fallthru
      _
    // Predicated region
    $region46: #{tpu_custom_call.1} parent=1 // pred_check
      _
    $region47: #{tpu_custom_call.1} parent=1 // pred_check_branch
      %93 = sbr.rel (0) target = $region49
    $region48: #{tpu_custom_call.1} parent=1 // pred_region
      _
    $region49: #{tpu_custom_call.1} parent=1 // pred_fallthru
      _
    // Predicated region
    $region50: #{tpu_custom_call.1} parent=1 // pred_check
      _
    $region51: #{tpu_custom_call.1} parent=1 // pred_check_branch
      %95 = sbr.rel (0) target = $region53
    $region52: #{tpu_custom_call.1} parent=1 // pred_region
      _
    $region53: #{tpu_custom_call.1} parent=1 // pred_fallthru
      _
    // Predicated region
    $region54: #{tpu_custom_call.1} parent=1 // pred_check
      _
    $region55: #{tpu_custom_call.1} parent=1 // pred_check_branch
      %97 = sbr.rel (0) target = $region57
    $region56: #{tpu_custom_call.1} parent=1 // pred_region
      _
    $region57: #{tpu_custom_call.1} parent=1 // pred_fallthru
      _
    // Predicated region
    $region58: #{tpu_custom_call.1} parent=1 // pred_check
      _
    $region59: #{tpu_custom_call.1} parent=1 // pred_check_branch
      %99 = sbr.rel (0) target = $region61
    $region60: #{tpu_custom_call.1} parent=1 // pred_region
      %100 = dma.done [#allocation4], 256
    $region61: #{tpu_custom_call.1} parent=1 // pred_fallthru
      _
    // Predicated region
    $region62: #{tpu_custom_call.1} parent=1 // pred_check
      _
    $region63: #{tpu_custom_call.1} parent=1 // pred_check_branch
      %102 = sbr.rel (0) target = $region65
    $region64: #{tpu_custom_call.1} parent=1 // pred_region
      %103 = dma.done [#allocation6], 16
    $region65: #{tpu_custom_call.1} parent=1 // pred_fallthru
      _
    // Predicated region
    $region66: #{tpu_custom_call.1} parent=1 // pred_check
      _
    $region67: #{tpu_custom_call.1} parent=1 // pred_check_branch
      %105 = sbr.rel (0) target = $region69
    $region68: #{tpu_custom_call.1} parent=1 // pred_region
      %106 = dma.done [#allocation6], 512
    $region69: #{tpu_custom_call.1} parent=1 // pred_fallthru
      _
    // Predicated region
    $region70: #{tpu_custom_call.1} parent=1 // pred_check
      _
    $region71: #{tpu_custom_call.1} parent=1 // pred_check_branch
      %108 = sbr.rel (0) target = $region73
    $region72: #{tpu_custom_call.1} parent=1 // pred_region
      %109 = dma.done [#allocation9], 16
    $region73: #{tpu_custom_call.1} parent=1 // pred_fallthru
      _
    // Predicated region
    $region74: #{tpu_custom_call.1} parent=1 // pred_check
      _
    $region75: #{tpu_custom_call.1} parent=1 // pred_check_branch
      %111 = sbr.rel (0) target = $region77
    $region76: #{tpu_custom_call.1} parent=1 // pred_region
      %112 = dma.done [#allocation9], 512
    $region77: #{tpu_custom_call.1} parent=1 // pred_fallthru
      _
    %v113 = vlaneseq
    %v114 = vand.u32 %v113, 127
    %vm115 = vcmp.ge.s32.totalorder %v114, 64
    %vm116 = vcmp.lt.s32.totalorder %v114, 96
    %vm117 = vmand %vm115, %vm116
    %v118 = vsel %vm117, 1.0, 0.5
    %v119 = vsel %vm117, 0.0, 0.5
    %v120 = vld [vmem:[%s0] sm:$0xff]
    %v121 = vld [vmem:[%s0 + $0x8] sm:$0xff]
    %v122 = vld [vmem:[%s0 + $0x10] sm:$0xff]
    %v123 = vld [vmem:[%s0 + $0x18] sm:$0xff]
    %v124 = vld [vmem:[%s0 + $0x20] sm:$0xff]
    %v125 = vld [vmem:[%s0 + $0x28] sm:$0xff]
    %v126 = vld [vmem:[%s0 + $0x30] sm:$0xff]
    %v127 = vld [vmem:[%s0 + $0x38] sm:$0xff]
    %v128 = vld [vmem:[#allocation3] sm:$0xff]
    %v129 = vld [vmem:[#allocation3 + $0x8] sm:$0xff]
    %v130 = vld [vmem:[%s3] sm:$0x1]
    %v132 = vlaneseq
    %v133 = vshrl.u32 %v132, 7
    %v134 = vsub.s32 0, %v133
    %v135 = vrot.slane %v130, %v134
    %vm137 = vcmask 130048
    %v139 = vsel %vm137, %v120, 0
    %v142 = vsel %vm137, %v121, 0
    %v145 = vsel %vm137, %v122, 0
    %v148 = vsel %vm137, %v123, 0
    %v151 = vsel %vm137, %v124, 0
    %v154 = vsel %vm137, %v125, 0
    %v157 = vsel %vm137, %v126, 0
    %v160 = vsel %vm137, %v127, 0
    %162 = vmatprep.subr.mxu0 0.0
    %163 = vmatpush1.msra.mxu0 0.0
    %164 = vmatprep.subr.mxu0 0.0
    %165 = vmatpush1.msra.mxu0 0.0
    %166 = vmatprep.subr.mxu0 0.0
    %167 = vmatpush1.msra.mxu0 0.0
    %168 = vmatprep.subr.mxu0 0.0
    %169 = vmatpush1.msra.mxu0 0.0
    %170 = vmatprep.subr.mxu0 0.0
    %171 = vmatpush1.msra.mxu0 0.0
    %172 = vmatprep.subr.mxu0 0.0
    %173 = vmatpush1.msra.mxu0 0.0
    %174 = vmatprep.subr.mxu0 0.0
    %175 = vmatpush1.msra.mxu0 0.0
    %176 = vmatprep.subr.mxu0 0.0
    %177 = vmatpush1.msra.mxu0 0.0
    %178 = vmatprep.subr.mxu0 0.0
    %179 = vmatpush1.msra.mxu0 0.0
    %180 = vmatprep.subr.mxu0 0.0
    %181 = vmatpush1.msra.mxu0 0.0
    %182 = vmatprep.subr.mxu0 0.0
    %183 = vmatpush1.msra.mxu0 0.0
    %184 = vmatprep.subr.mxu0 0.0
    %185 = vmatpush1.msra.mxu0 0.0
    %186 = vmatprep.subr.mxu0 0.0
    %187 = vmatpush1.msra.mxu0 0.0
    %188 = vmatprep.subr.mxu0 0.0
    %189 = vmatpush1.msra.mxu0 0.0
    %190 = vmatprep.subr.mxu0 0.0
    %191 = vmatpush1.msra.mxu0 %v129
    %192 = vmatprep.subr.mxu0 0.0
    %193 = vmatpush1.msra.mxu0 %v128
    %194 = vmatprep.subr.mxu0 0.0
    %195 = vmatpush2.msra.mxu0 0.0
    %196 = vmatprep.subr.mxu0 0.0
    %197 = vmatpush2.msra.mxu0 0.0
    %198 = vmatprep.subr.mxu0 0.0
    %199 = vmatpush2.msra.mxu0 0.0
    %200 = vmatprep.subr.mxu0 0.0
    %201 = vmatpush2.msra.mxu0 0.0
    %202 = vmatprep.subr.mxu0 0.0
    %203 = vmatpush2.msra.mxu0 0.0
    %204 = vmatprep.subr.mxu0 0.0
    %205 = vmatpush2.msra.mxu0 0.0
    %206 = vmatprep.subr.mxu0 0.0
    %207 = vmatpush2.msra.mxu0 0.0
    %208 = vmatprep.subr.mxu0 0.0
    %209 = vmatpush2.msra.mxu0 0.0
    %210 = vmatprep.subr.mxu0 0.0
    %211 = vmatpush2.msra.mxu0 0.0
    %212 = vmatprep.subr.mxu0 0.0
    %213 = vmatpush2.msra.mxu0 0.0
    %214 = vmatprep.subr.mxu0 0.0
    %215 = vmatpush2.msra.mxu0 0.0
    %216 = vmatprep.subr.mxu0 0.0
    %217 = vmatpush2.msra.mxu0 0.0
    %218 = vmatprep.subr.mxu0 0.0
    %219 = vmatpush2.msra.mxu0 0.0
    %220 = vmatprep.subr.mxu0 0.0
    %221 = vmatpush2.msra.mxu0 0.0
    %222 = vmatprep.subr.mxu0 0.0
    %223 = vmatpush2.msra.mxu0 0.0
    %224 = vmatprep.subr.mxu0 0.0
    %225 = vmatpush2.msra.mxu0 0.0
    %226 = vmatprep.mubr.f32.mxu0 0.0
    %227 = vmatmul.mubr.f32.gmra.mxu0 %v139
    %v228 = vpop.f32.mrf.mxu0
    %v229 = vadd.f32 %v135, %v228
    %v230 = vpop.f32.mrf.mxu0
    %231 = vmatprep.mubr.f32.mxu0 0.0
    %232 = vmatmul.mubr.f32.gmra.mxu0 %v142
    %v233 = vpop.f32.mrf.mxu0
    %v234 = vadd.f32 %v135, %v233
    %v235 = vpop.f32.mrf.mxu0
    %236 = vmatprep.mubr.f32.mxu0 0.0
    %237 = vmatmul.mubr.f32.gmra.mxu0 %v145
    %v238 = vpop.f32.mrf.mxu0
    %v239 = vadd.f32 %v135, %v238
    %v240 = vpop.f32.mrf.mxu0
    %241 = vmatprep.mubr.f32.mxu0 0.0
    %242 = vmatmul.mubr.f32.gmra.mxu0 %v148
    %v243 = vpop.f32.mrf.mxu0
    %v244 = vadd.f32 %v135, %v243
    %v245 = vpop.f32.mrf.mxu0
    %246 = vmatprep.mubr.f32.mxu0 0.0
    %247 = vmatmul.mubr.f32.gmra.mxu0 %v151
    %v248 = vpop.f32.mrf.mxu0
    %v249 = vadd.f32 %v135, %v248
    %v250 = vpop.f32.mrf.mxu0
    %251 = vmatprep.mubr.f32.mxu0 0.0
    %252 = vmatmul.mubr.f32.gmra.mxu0 %v154
    %v253 = vpop.f32.mrf.mxu0
    %v254 = vadd.f32 %v135, %v253
    %v255 = vpop.f32.mrf.mxu0
    %256 = vmatprep.mubr.f32.mxu0 0.0
    %257 = vmatmul.mubr.f32.gmra.mxu0 %v157
    %v258 = vpop.f32.mrf.mxu0
    %v259 = vadd.f32 %v135, %v258
    %v260 = vpop.f32.mrf.mxu0
    %261 = vmatprep.mubr.f32.mxu0 0.0
    %262 = vmatmul.mubr.f32.gmra.mxu0 %v160
    %v263 = vpop.f32.mrf.mxu0
    %v264 = vadd.f32 %v135, %v263
    %v265 = vpop.f32.mrf.mxu0
    %266 = vdwg.mxu0
    %v267 = vld [vmem:[%s2] sm:$0xff]
    %v268 = vld [vmem:[%s2 + $0x8] sm:$0xff]
    %v269 = vld [vmem:[%s2 + $0x10] sm:$0xff]
    %v270 = vld [vmem:[%s2 + $0x18] sm:$0xff]
    %v271 = vld [vmem:[%s4] sm:$0xff]
    %v272 = vld [vmem:[%s4 + $0x8] sm:$0xff]
    %v273 = vld [vmem:[%s4 + $0x10] sm:$0xff]
    %v274 = vld [vmem:[%s4 + $0x18] sm:$0xff]
    %v275 = vld [vmem:[%s4 + $0x20] sm:$0xff]
    %v276 = vld [vmem:[%s4 + $0x28] sm:$0xff]
    %v277 = vld [vmem:[%s4 + $0x30] sm:$0xff]
    %v278 = vld [vmem:[%s4 + $0x38] sm:$0xff]
    %v279 = vld [vmem:[#allocation5] sm:$0x1]
    %v281 = vlaneseq
    %v282 = vshrl.u32 %v281, 7
    %v283 = vsub.s32 0, %v282
    %v284 = vrot.slane %v279, %v283
    %vm286 = vcmask 261120
    %v288 = vsel %vm286, 0.0, 0
    %290 = vmatprep.subr.mxu0 0.0
    %291 = vmatpush1.msra.mxu0 0.0
    %292 = vmatprep.subr.mxu0 0.0
    %293 = vmatpush1.msra.mxu0 0.0
    %294 = vmatprep.subr.mxu0 0.0
    %295 = vmatpush1.msra.mxu0 0.0
    %296 = vmatprep.subr.mxu0 0.0
    %297 = vmatpush1.msra.mxu0 0.0
    %298 = vmatprep.subr.mxu0 0.0
    %299 = vmatpush1.msra.mxu0 0.0
    %300 = vmatprep.subr.mxu0 0.0
    %301 = vmatpush1.msra.mxu0 0.0
    %302 = vmatprep.subr.mxu0 0.0
    %303 = vmatpush1.msra.mxu0 0.0
    %304 = vmatprep.subr.mxu0 0.0
    %305 = vmatpush1.msra.mxu0 0.0
    %306 = vmatprep.subr.mxu0 0.0
    %307 = vmatpush1.msra.mxu0 0.0
    %308 = vmatprep.subr.mxu0 0.0
    %309 = vmatpush1.msra.mxu0 0.0
    %310 = vmatprep.subr.mxu0 0.0
    %311 = vmatpush1.msra.mxu0 0.0
    %312 = vmatprep.subr.mxu0 0.0
    %313 = vmatpush1.msra.mxu0 0.0
    %314 = vmatprep.subr.mxu0 0.0
    %315 = vmatpush1.msra.mxu0 %v270
    %316 = vmatprep.subr.mxu0 0.0
    %317 = vmatpush1.msra.mxu0 %v269
    %318 = vmatprep.subr.mxu0 0.0
    %319 = vmatpush1.msra.mxu0 %v268
    %320 = vmatprep.subr.mxu0 0.0
    %321 = vmatpush1.msra.mxu0 %v267
    %322 = vmatprep.subr.mxu0 0.0
    %323 = vmatpush2.msra.mxu0 0.0
    %324 = vmatprep.subr.mxu0 0.0
    %325 = vmatpush2.msra.mxu0 0.0
    %326 = vmatprep.subr.mxu0 0.0
    %327 = vmatpush2.msra.mxu0 0.0
    %328 = vmatprep.subr.mxu0 0.0
    %329 = vmatpush2.msra.mxu0 0.0
    %330 = vmatprep.subr.mxu0 0.0
    %331 = vmatpush2.msra.mxu0 0.0
    %332 = vmatprep.subr.mxu0 0.0
    %333 = vmatpush2.msra.mxu0 0.0
    %334 = vmatprep.subr.mxu0 0.0
    %335 = vmatpush2.msra.mxu0 0.0
    %336 = vmatprep.subr.mxu0 0.0
    %337 = vmatpush2.msra.mxu0 0.0
    %338 = vmatprep.subr.mxu0 0.0
    %339 = vmatpush2.msra.mxu0 0.0
    %340 = vmatprep.subr.mxu0 0.0
    %341 = vmatpush2.msra.mxu0 0.0
    %342 = vmatprep.subr.mxu0 0.0
    %343 = vmatpush2.msra.mxu0 0.0
    %344 = vmatprep.subr.mxu0 0.0
    %345 = vmatpush2.msra.mxu0 0.0
    %346 = vmatprep.subr.mxu0 0.0
    %347 = vmatpush2.msra.mxu0 0.0
    %348 = vmatprep.subr.mxu0 0.0
    %349 = vmatpush2.msra.mxu0 0.0
    %350 = vmatprep.subr.mxu0 0.0
    %351 = vmatpush2.msra.mxu0 0.0
    %352 = vmatprep.subr.mxu0 0.0
    %353 = vmatpush2.msra.mxu0 0.0
    %354 = vmatprep.mubr.f32.mxu0 0.0
    %355 = vmatmul.mubr.f32.gmra.mxu0 %v288
    %v356 = vpop.f32.mrf.mxu0
    %v357 = vadd.f32 0.0, %v356
    %v358 = vpop.f32.mrf.mxu0
    %359 = vdwg.mxu0
    %v360 = vadd.f32 %v229, %v357
    %v361 = vtanh.pop %v360
    %v362 = vmul.f32 %v361, %v118
    %v363 = vadd.f32 %v362, %v119
    %v364 = vmul.f32 %v363, 0.0
    %366 = vrot.lane.b32.xlu0 %v363, 64
    %v367 = vpop.permute.xlu0 %366
    %v369 = vmul.f32 %v363, %v367
    %371 = vrot.lane.b32.xlu0 %v369, 32
    %v372 = vpop.permute.xlu0 %371
    %v374 = vadd.f32 %v364, %v372
    %v375 = vtanh.pop %v374
    %377 = vrot.lane.b32.xlu0 %v375, 64
    %v378 = vpop.permute.xlu0 %377
    %v380 = vmul.f32 %v363, %v378
    %382 = vrot.lane.b32.xlu0 %v380, 32
    %v383 = vpop.permute.xlu0 %382
    %v384 = vsel %vm286, %v383, 0
    %386 = vmatprep.subr.mxu0 0.0
    %387 = vmatpush1.msra.mxu0 0.0
    %388 = vmatprep.subr.mxu0 0.0
    %389 = vmatpush1.msra.mxu0 0.0
    %390 = vmatprep.subr.mxu0 0.0
    %391 = vmatpush1.msra.mxu0 0.0
    %392 = vmatprep.subr.mxu0 0.0
    %393 = vmatpush1.msra.mxu0 0.0
    %394 = vmatprep.subr.mxu0 0.0
    %395 = vmatpush1.msra.mxu0 0.0
    %396 = vmatprep.subr.mxu0 0.0
    %397 = vmatpush1.msra.mxu0 0.0
    %398 = vmatprep.subr.mxu0 0.0
    %399 = vmatpush1.msra.mxu0 0.0
    %400 = vmatprep.subr.mxu0 0.0
    %401 = vmatpush1.msra.mxu0 0.0
    %402 = vmatprep.subr.mxu0 0.0
    %403 = vmatpush1.msra.mxu0 0.0
    %404 = vmatprep.subr.mxu0 0.0
    %405 = vmatpush1.msra.mxu0 0.0
    %406 = vmatprep.subr.mxu0 0.0
    %407 = vmatpush1.msra.mxu0 0.0
    %408 = vmatprep.subr.mxu0 0.0
    %409 = vmatpush1.msra.mxu0 0.0
    %410 = vmatprep.subr.mxu0 0.0
    %411 = vmatpush1.msra.mxu0 %v270
    %412 = vmatprep.subr.mxu0 0.0
    %413 = vmatpush1.msra.mxu0 %v269
    %414 = vmatprep.subr.mxu0 0.0
    %415 = vmatpush1.msra.mxu0 %v268
    %416 = vmatprep.subr.mxu0 0.0
    %417 = vmatpush1.msra.mxu0 %v267
    %418 = vmatprep.subr.mxu0 0.0
    %419 = vmatpush2.msra.mxu0 0.0
    %420 = vmatprep.subr.mxu0 0.0
    %421 = vmatpush2.msra.mxu0 0.0
    %422 = vmatprep.subr.mxu0 0.0
    %423 = vmatpush2.msra.mxu0 0.0
    %424 = vmatprep.subr.mxu0 0.0
    %425 = vmatpush2.msra.mxu0 0.0
    %426 = vmatprep.subr.mxu0 0.0
    %427 = vmatpush2.msra.mxu0 0.0
    %428 = vmatprep.subr.mxu0 0.0
    %429 = vmatpush2.msra.mxu0 0.0
    %430 = vmatprep.subr.mxu0 0.0
    %431 = vmatpush2.msra.mxu0 0.0
    %432 = vmatprep.subr.mxu0 0.0
    %433 = vmatpush2.msra.mxu0 0.0
    %434 = vmatprep.subr.mxu0 0.0
    %435 = vmatpush2.msra.mxu0 0.0
    %436 = vmatprep.subr.mxu0 0.0
    %437 = vmatpush2.msra.mxu0 0.0
    %438 = vmatprep.subr.mxu0 0.0
    %439 = vmatpush2.msra.mxu0 0.0
    %440 = vmatprep.subr.mxu0 0.0
    %441 = vmatpush2.msra.mxu0 0.0
    %442 = vmatprep.subr.mxu0 0.0
    %443 = vmatpush2.msra.mxu0 0.0
    %444 = vmatprep.subr.mxu0 0.0
    %445 = vmatpush2.msra.mxu0 0.0
    %446 = vmatprep.subr.mxu0 0.0
    %447 = vmatpush2.msra.mxu0 0.0
    %448 = vmatprep.subr.mxu0 0.0
    %449 = vmatpush2.msra.mxu0 0.0
    %450 = vmatprep.mubr.f32.mxu0 0.0
    %451 = vmatmul.mubr.f32.gmra.mxu0 %v384
    %v452 = vpop.f32.mrf.mxu0
    %v453 = vadd.f32 0.0, %v452
    %v454 = vpop.f32.mrf.mxu0
    %455 = vdwg.mxu0
    %v456 = vadd.f32 %v234, %v453
    %v457 = vtanh.pop %v456
    %v458 = vmul.f32 %v457, %v118
    %v459 = vadd.f32 %v458, %v119
    %v460 = vmul.f32 %v459, %v374
    %462 = vrot.lane.b32.xlu0 %v459, 64
    %v463 = vpop.permute.xlu0 %462
    %v465 = vmul.f32 %v459, %v463
    %467 = vrot.lane.b32.xlu0 %v465, 32
    %v468 = vpop.permute.xlu0 %467
    %v470 = vadd.f32 %v460, %v468
    %v471 = vtanh.pop %v470
    %473 = vrot.lane.b32.xlu0 %v471, 64
    %v474 = vpop.permute.xlu0 %473
    %v476 = vmul.f32 %v459, %v474
    %v478 = vsel %vm286, %v383, 0.0
    %vm479 = vcmask 523264
    %v481 = vsel %vm479, %v478, 0
    %483 = vmatprep.subr.mxu0 0.0
    %484 = vmatpush1.msra.mxu0 0.0
    %485 = vmatprep.subr.mxu0 0.0
    %486 = vmatpush1.msra.mxu0 0.0
    %487 = vmatprep.subr.mxu0 0.0
    %488 = vmatpush1.msra.mxu0 0.0
    %489 = vmatprep.subr.mxu0 0.0
    %490 = vmatpush1.msra.mxu0 0.0
    %491 = vmatprep.subr.mxu0 0.0
    %492 = vmatpush1.msra.mxu0 0.0
    %493 = vmatprep.subr.mxu0 0.0
    %494 = vmatpush1.msra.mxu0 0.0
    %495 = vmatprep.subr.mxu0 0.0
    %496 = vmatpush1.msra.mxu0 0.0
    %497 = vmatprep.subr.mxu0 0.0
    %498 = vmatpush1.msra.mxu0 0.0
    %499 = vmatprep.subr.mxu0 0.0
    %500 = vmatpush1.msra.mxu0 %v278
    %501 = vmatprep.subr.mxu0 0.0
    %502 = vmatpush1.msra.mxu0 %v277
    %503 = vmatprep.subr.mxu0 0.0
    %504 = vmatpush1.msra.mxu0 %v276
    %505 = vmatprep.subr.mxu0 0.0
    %506 = vmatpush1.msra.mxu0 %v275
    %507 = vmatprep.subr.mxu0 0.0
    %508 = vmatpush1.msra.mxu0 %v274
    %509 = vmatprep.subr.mxu0 0.0
    %510 = vmatpush1.msra.mxu0 %v273
    %511 = vmatprep.subr.mxu0 0.0
    %512 = vmatpush1.msra.mxu0 %v272
    %513 = vmatprep.subr.mxu0 0.0
    %514 = vmatpush1.msra.mxu0 %v271
    %515 = vmatprep.subr.mxu0 0.0
    %516 = vmatpush2.msra.mxu0 0.0
    %517 = vmatprep.subr.mxu0 0.0
    %518 = vmatpush2.msra.mxu0 0.0
    %519 = vmatprep.subr.mxu0 0.0
    %520 = vmatpush2.msra.mxu0 0.0
    %521 = vmatprep.subr.mxu0 0.0
    %522 = vmatpush2.msra.mxu0 0.0
    %523 = vmatprep.subr.mxu0 0.0
    %524 = vmatpush2.msra.mxu0 0.0
    %525 = vmatprep.subr.mxu0 0.0
    %526 = vmatpush2.msra.mxu0 0.0
    %527 = vmatprep.subr.mxu0 0.0
    %528 = vmatpush2.msra.mxu0 0.0
    %529 = vmatprep.subr.mxu0 0.0
    %530 = vmatpush2.msra.mxu0 0.0
    %531 = vmatprep.subr.mxu0 0.0
    %532 = vmatpush2.msra.mxu0 0.0
    %533 = vmatprep.subr.mxu0 0.0
    %534 = vmatpush2.msra.mxu0 0.0
    %535 = vmatprep.subr.mxu0 0.0
    %536 = vmatpush2.msra.mxu0 0.0
    %537 = vmatprep.subr.mxu0 0.0
    %538 = vmatpush2.msra.mxu0 0.0
    %539 = vmatprep.subr.mxu0 0.0
    %540 = vmatpush2.msra.mxu0 0.0
    %541 = vmatprep.subr.mxu0 0.0
    %542 = vmatpush2.msra.mxu0 0.0
    %543 = vmatprep.subr.mxu0 0.0
    %544 = vmatpush2.msra.mxu0 0.0
    %545 = vmatprep.subr.mxu0 0.0
    %546 = vmatpush2.msra.mxu0 0.0
    %547 = vmatprep.mubr.f32.mxu0 0.0
    %548 = vmatmul.mubr.f32.gmra.mxu0 %v481
    %v549 = vpop.f32.mrf.mxu0
    %v550 = vadd.f32 %v284, %v549
    %v551 = vpop.f32.mrf.mxu0
    %552 = vdwg.mxu0
    %v553 = vtanh.pop %v550
    %v554 = vmul.f32 %v553, %v118
    %v555 = vadd.f32 %v554, %v119
    %v556 = vmul.f32 %v555, 0.0
    %558 = vrot.lane.b32.xlu0 %v555, 64
    %v559 = vpop.permute.xlu0 %558
    %v561 = vmul.f32 %v555, %v559
    %563 = vrot.lane.b32.xlu0 %v561, 32
    %v564 = vpop.permute.xlu0 %563
    %v566 = vadd.f32 %v556, %v564
    %v567 = vtanh.pop %v566
    %569 = vrot.lane.b32.xlu0 %v567, 64
    %v570 = vpop.permute.xlu0 %569
    %v572 = vmul.f32 %v555, %v570
    %574 = vrot.lane.b32.xlu0 %v476, 32
    %v575 = vpop.permute.xlu0 %574
    %v576 = vsel %vm286, %v575, 0
    %578 = vmatprep.subr.mxu0 0.0
    %579 = vmatpush1.msra.mxu0 0.0
    %580 = vmatprep.subr.mxu0 0.0
    %581 = vmatpush1.msra.mxu0 0.0
    %582 = vmatprep.subr.mxu0 0.0
    %583 = vmatpush1.msra.mxu0 0.0
    %584 = vmatprep.subr.mxu0 0.0
    %585 = vmatpush1.msra.mxu0 0.0
    %586 = vmatprep.subr.mxu0 0.0
    %587 = vmatpush1.msra.mxu0 0.0
    %588 = vmatprep.subr.mxu0 0.0
    %589 = vmatpush1.msra.mxu0 0.0
    %590 = vmatprep.subr.mxu0 0.0
    %591 = vmatpush1.msra.mxu0 0.0
    %592 = vmatprep.subr.mxu0 0.0
    %593 = vmatpush1.msra.mxu0 0.0
    %594 = vmatprep.subr.mxu0 0.0
    %595 = vmatpush1.msra.mxu0 0.0
    %596 = vmatprep.subr.mxu0 0.0
    %597 = vmatpush1.msra.mxu0 0.0
    %598 = vmatprep.subr.mxu0 0.0
    %599 = vmatpush1.msra.mxu0 0.0
    %600 = vmatprep.subr.mxu0 0.0
    %601 = vmatpush1.msra.mxu0 0.0
    %602 = vmatprep.subr.mxu0 0.0
    %603 = vmatpush1.msra.mxu0 %v270
    %604 = vmatprep.subr.mxu0 0.0
    %605 = vmatpush1.msra.mxu0 %v269
    %606 = vmatprep.subr.mxu0 0.0
    %607 = vmatpush1.msra.mxu0 %v268
    %608 = vmatprep.subr.mxu0 0.0
    %609 = vmatpush1.msra.mxu0 %v267
    %610 = vmatprep.subr.mxu0 0.0
    %611 = vmatpush2.msra.mxu0 0.0
    %612 = vmatprep.subr.mxu0 0.0
    %613 = vmatpush2.msra.mxu0 0.0
    %614 = vmatprep.subr.mxu0 0.0
    %615 = vmatpush2.msra.mxu0 0.0
    %616 = vmatprep.subr.mxu0 0.0
    %617 = vmatpush2.msra.mxu0 0.0
    %618 = vmatprep.subr.mxu0 0.0
    %619 = vmatpush2.msra.mxu0 0.0
    %620 = vmatprep.subr.mxu0 0.0
    %621 = vmatpush2.msra.mxu0 0.0
    %622 = vmatprep.subr.mxu0 0.0
    %623 = vmatpush2.msra.mxu0 0.0
    %624 = vmatprep.subr.mxu0 0.0
    %625 = vmatpush2.msra.mxu0 0.0
    %626 = vmatprep.subr.mxu0 0.0
    %627 = vmatpush2.msra.mxu0 0.0
    %628 = vmatprep.subr.mxu0 0.0
    %629 = vmatpush2.msra.mxu0 0.0
    %630 = vmatprep.subr.mxu0 0.0
    %631 = vmatpush2.msra.mxu0 0.0
    %632 = vmatprep.subr.mxu0 0.0
    %633 = vmatpush2.msra.mxu0 0.0
    %634 = vmatprep.subr.mxu0 0.0
    %635 = vmatpush2.msra.mxu0 0.0
    %636 = vmatprep.subr.mxu0 0.0
    %637 = vmatpush2.msra.mxu0 0.0
    %638 = vmatprep.subr.mxu0 0.0
    %639 = vmatpush2.msra.mxu0 0.0
    %640 = vmatprep.subr.mxu0 0.0
    %641 = vmatpush2.msra.mxu0 0.0
    %642 = vmatprep.mubr.f32.mxu0 0.0
    %643 = vmatmul.mubr.f32.gmra.mxu0 %v576
    %v644 = vpop.f32.mrf.mxu0
    %v645 = vadd.f32 0.0, %v644
    %v646 = vpop.f32.mrf.mxu0
    %647 = vdwg.mxu0
    %v648 = vadd.f32 %v239, %v645
    %v649 = vtanh.pop %v648
    %v650 = vmul.f32 %v649, %v118
    %v651 = vadd.f32 %v650, %v119
    %v652 = vmul.f32 %v651, %v470
    %654 = vrot.lane.b32.xlu0 %v651, 64
    %v655 = vpop.permute.xlu0 %654
    %v657 = vmul.f32 %v651, %v655
    %659 = vrot.lane.b32.xlu0 %v657, 32
    %v660 = vpop.permute.xlu0 %659
    %v662 = vadd.f32 %v652, %v660
    %v663 = vtanh.pop %v662
    %665 = vrot.lane.b32.xlu0 %v663, 64
    %v666 = vpop.permute.xlu0 %665
    %v668 = vmul.f32 %v651, %v666
    %671 = vrot.lane.b32.xlu0 %v572, 64
    %v672 = vpop.permute.xlu0 %671
    %v674 = vsel %vm286, %v575, %v672
    %v676 = vsel %vm479, %v674, 0
    %678 = vmatprep.subr.mxu0 0.0
    %679 = vmatpush1.msra.mxu0 0.0
    %680 = vmatprep.subr.mxu0 0.0
    %681 = vmatpush1.msra.mxu0 0.0
    %682 = vmatprep.subr.mxu0 0.0
    %683 = vmatpush1.msra.mxu0 0.0
    %684 = vmatprep.subr.mxu0 0.0
    %685 = vmatpush1.msra.mxu0 0.0
    %686 = vmatprep.subr.mxu0 0.0
    %687 = vmatpush1.msra.mxu0 0.0
    %688 = vmatprep.subr.mxu0 0.0
    %689 = vmatpush1.msra.mxu0 0.0
    %690 = vmatprep.subr.mxu0 0.0
    %691 = vmatpush1.msra.mxu0 0.0
    %692 = vmatprep.subr.mxu0 0.0
    %693 = vmatpush1.msra.mxu0 0.0
    %694 = vmatprep.subr.mxu0 0.0
    %695 = vmatpush1.msra.mxu0 %v278
    %696 = vmatprep.subr.mxu0 0.0
    %697 = vmatpush1.msra.mxu0 %v277
    %698 = vmatprep.subr.mxu0 0.0
    %699 = vmatpush1.msra.mxu0 %v276
    %700 = vmatprep.subr.mxu0 0.0
    %701 = vmatpush1.msra.mxu0 %v275
    %702 = vmatprep.subr.mxu0 0.0
    %703 = vmatpush1.msra.mxu0 %v274
    %704 = vmatprep.subr.mxu0 0.0
    %705 = vmatpush1.msra.mxu0 %v273
    %706 = vmatprep.subr.mxu0 0.0
    %707 = vmatpush1.msra.mxu0 %v272
    %708 = vmatprep.subr.mxu0 0.0
    %709 = vmatpush1.msra.mxu0 %v271
    %710 = vmatprep.subr.mxu0 0.0
    %711 = vmatpush2.msra.mxu0 0.0
    %712 = vmatprep.subr.mxu0 0.0
    %713 = vmatpush2.msra.mxu0 0.0
    %714 = vmatprep.subr.mxu0 0.0
    %715 = vmatpush2.msra.mxu0 0.0
    %716 = vmatprep.subr.mxu0 0.0
    %717 = vmatpush2.msra.mxu0 0.0
    %718 = vmatprep.subr.mxu0 0.0
    %719 = vmatpush2.msra.mxu0 0.0
    %720 = vmatprep.subr.mxu0 0.0
    %721 = vmatpush2.msra.mxu0 0.0
    %722 = vmatprep.subr.mxu0 0.0
    %723 = vmatpush2.msra.mxu0 0.0
    %724 = vmatprep.subr.mxu0 0.0
    %725 = vmatpush2.msra.mxu0 0.0
    %726 = vmatprep.subr.mxu0 0.0
    %727 = vmatpush2.msra.mxu0 0.0
    %728 = vmatprep.subr.mxu0 0.0
    %729 = vmatpush2.msra.mxu0 0.0
    %730 = vmatprep.subr.mxu0 0.0
    %731 = vmatpush2.msra.mxu0 0.0
    %732 = vmatprep.subr.mxu0 0.0
    %733 = vmatpush2.msra.mxu0 0.0
    %734 = vmatprep.subr.mxu0 0.0
    %735 = vmatpush2.msra.mxu0 0.0
    %736 = vmatprep.subr.mxu0 0.0
    %737 = vmatpush2.msra.mxu0 0.0
    %738 = vmatprep.subr.mxu0 0.0
    %739 = vmatpush2.msra.mxu0 0.0
    %740 = vmatprep.subr.mxu0 0.0
    %741 = vmatpush2.msra.mxu0 0.0
    %742 = vmatprep.mubr.f32.mxu0 0.0
    %743 = vmatmul.mubr.f32.gmra.mxu0 %v676
    %v744 = vpop.f32.mrf.mxu0
    %v745 = vadd.f32 %v284, %v744
    %v746 = vpop.f32.mrf.mxu0
    %747 = vdwg.mxu0
    %v748 = vtanh.pop %v745
    %v749 = vmul.f32 %v748, %v118
    %v750 = vadd.f32 %v749, %v119
    %v751 = vmul.f32 %v750, %v566
    %753 = vrot.lane.b32.xlu0 %v750, 64
    %v754 = vpop.permute.xlu0 %753
    %v756 = vmul.f32 %v750, %v754
    %758 = vrot.lane.b32.xlu0 %v756, 32
    %v759 = vpop.permute.xlu0 %758
    %v761 = vadd.f32 %v751, %v759
    %v762 = vtanh.pop %v761
    %764 = vrot.lane.b32.xlu0 %v762, 64
    %v765 = vpop.permute.xlu0 %764
    %v767 = vmul.f32 %v750, %v765
    %769 = vrot.lane.b32.xlu0 %v668, 32
    %v770 = vpop.permute.xlu0 %769
    %v771 = vsel %vm286, %v770, 0
    %773 = vmatprep.subr.mxu0 0.0
    %774 = vmatpush1.msra.mxu0 0.0
    %775 = vmatprep.subr.mxu0 0.0
    %776 = vmatpush1.msra.mxu0 0.0
    %777 = vmatprep.subr.mxu0 0.0
    %778 = vmatpush1.msra.mxu0 0.0
    %779 = vmatprep.subr.mxu0 0.0
    %780 = vmatpush1.msra.mxu0 0.0
    %781 = vmatprep.subr.mxu0 0.0
    %782 = vmatpush1.msra.mxu0 0.0
    %783 = vmatprep.subr.mxu0 0.0
    %784 = vmatpush1.msra.mxu0 0.0
    %785 = vmatprep.subr.mxu0 0.0
    %786 = vmatpush1.msra.mxu0 0.0
    %787 = vmatprep.subr.mxu0 0.0
    %788 = vmatpush1.msra.mxu0 0.0
    %789 = vmatprep.subr.mxu0 0.0
    %790 = vmatpush1.msra.mxu0 0.0
    %791 = vmatprep.subr.mxu0 0.0
    %792 = vmatpush1.msra.mxu0 0.0
    %793 = vmatprep.subr.mxu0 0.0
    %794 = vmatpush1.msra.mxu0 0.0
    %795 = vmatprep.subr.mxu0 0.0
    %796 = vmatpush1.msra.mxu0 0.0
    %797 = vmatprep.subr.mxu0 0.0
    %798 = vmatpush1.msra.mxu0 %v270
    %799 = vmatprep.subr.mxu0 0.0
    %800 = vmatpush1.msra.mxu0 %v269
    %801 = vmatprep.subr.mxu0 0.0
    %802 = vmatpush1.msra.mxu0 %v268
    %803 = vmatprep.subr.mxu0 0.0
    %804 = vmatpush1.msra.mxu0 %v267
    %805 = vmatprep.subr.mxu0 0.0
    %806 = vmatpush2.msra.mxu0 0.0
    %807 = vmatprep.subr.mxu0 0.0
    %808 = vmatpush2.msra.mxu0 0.0
    %809 = vmatprep.subr.mxu0 0.0
    %810 = vmatpush2.msra.mxu0 0.0
    %811 = vmatprep.subr.mxu0 0.0
    %812 = vmatpush2.msra.mxu0 0.0
    %813 = vmatprep.subr.mxu0 0.0
    %814 = vmatpush2.msra.mxu0 0.0
    %815 = vmatprep.subr.mxu0 0.0
    %816 = vmatpush2.msra.mxu0 0.0
    %817 = vmatprep.subr.mxu0 0.0
    %818 = vmatpush2.msra.mxu0 0.0
    %819 = vmatprep.subr.mxu0 0.0
    %820 = vmatpush2.msra.mxu0 0.0
    %821 = vmatprep.subr.mxu0 0.0
    %822 = vmatpush2.msra.mxu0 0.0
    %823 = vmatprep.subr.mxu0 0.0
    %824 = vmatpush2.msra.mxu0 0.0
    %825 = vmatprep.subr.mxu0 0.0
    %826 = vmatpush2.msra.mxu0 0.0
    %827 = vmatprep.subr.mxu0 0.0
    %828 = vmatpush2.msra.mxu0 0.0
    %829 = vmatprep.subr.mxu0 0.0
    %830 = vmatpush2.msra.mxu0 0.0
    %831 = vmatprep.subr.mxu0 0.0
    %832 = vmatpush2.msra.mxu0 0.0
    %833 = vmatprep.subr.mxu0 0.0
    %834 = vmatpush2.msra.mxu0 0.0
    %835 = vmatprep.subr.mxu0 0.0
    %836 = vmatpush2.msra.mxu0 0.0
    %837 = vmatprep.mubr.f32.mxu0 0.0
    %838 = vmatmul.mubr.f32.gmra.mxu0 %v771
    %v839 = vpop.f32.mrf.mxu0
    %v840 = vadd.f32 0.0, %v839
    %v841 = vpop.f32.mrf.mxu0
    %842 = vdwg.mxu0
    %v843 = vadd.f32 %v244, %v840
    %v844 = vtanh.pop %v843
    %v845 = vmul.f32 %v844, %v118
    %v846 = vadd.f32 %v845, %v119
    %v847 = vmul.f32 %v846, %v662
    %849 = vrot.lane.b32.xlu0 %v846, 64
    %v850 = vpop.permute.xlu0 %849
    %v852 = vmul.f32 %v846, %v850
    %854 = vrot.lane.b32.xlu0 %v852, 32
    %v855 = vpop.permute.xlu0 %854
    %v857 = vadd.f32 %v847, %v855
    %v858 = vtanh.pop %v857
    %860 = vrot.lane.b32.xlu0 %v858, 64
    %v861 = vpop.permute.xlu0 %860
    %v863 = vmul.f32 %v846, %v861
    %866 = vrot.lane.b32.xlu0 %v767, 64
    %v867 = vpop.permute.xlu0 %866
    %v869 = vsel %vm286, %v770, %v867
    %v871 = vsel %vm479, %v869, 0
    %873 = vmatprep.subr.mxu0 0.0
    %874 = vmatpush1.msra.mxu0 0.0
    %875 = vmatprep.subr.mxu0 0.0
    %876 = vmatpush1.msra.mxu0 0.0
    %877 = vmatprep.subr.mxu0 0.0
    %878 = vmatpush1.msra.mxu0 0.0
    %879 = vmatprep.subr.mxu0 0.0
    %880 = vmatpush1.msra.mxu0 0.0
    %881 = vmatprep.subr.mxu0 0.0
    %882 = vmatpush1.msra.mxu0 0.0
    %883 = vmatprep.subr.mxu0 0.0
    %884 = vmatpush1.msra.mxu0 0.0
    %885 = vmatprep.subr.mxu0 0.0
    %886 = vmatpush1.msra.mxu0 0.0
    %887 = vmatprep.subr.mxu0 0.0
    %888 = vmatpush1.msra.mxu0 0.0
    %889 = vmatprep.subr.mxu0 0.0
    %890 = vmatpush1.msra.mxu0 %v278
    %891 = vmatprep.subr.mxu0 0.0
    %892 = vmatpush1.msra.mxu0 %v277
    %893 = vmatprep.subr.mxu0 0.0
    %894 = vmatpush1.msra.mxu0 %v276
    %895 = vmatprep.subr.mxu0 0.0
    %896 = vmatpush1.msra.mxu0 %v275
    %897 = vmatprep.subr.mxu0 0.0
    %898 = vmatpush1.msra.mxu0 %v274
    %899 = vmatprep.subr.mxu0 0.0
    %900 = vmatpush1.msra.mxu0 %v273
    %901 = vmatprep.subr.mxu0 0.0
    %902 = vmatpush1.msra.mxu0 %v272
    %903 = vmatprep.subr.mxu0 0.0
    %904 = vmatpush1.msra.mxu0 %v271
    %905 = vmatprep.subr.mxu0 0.0
    %906 = vmatpush2.msra.mxu0 0.0
    %907 = vmatprep.subr.mxu0 0.0
    %908 = vmatpush2.msra.mxu0 0.0
    %909 = vmatprep.subr.mxu0 0.0
    %910 = vmatpush2.msra.mxu0 0.0
    %911 = vmatprep.subr.mxu0 0.0
    %912 = vmatpush2.msra.mxu0 0.0
    %913 = vmatprep.subr.mxu0 0.0
    %914 = vmatpush2.msra.mxu0 0.0
    %915 = vmatprep.subr.mxu0 0.0
    %916 = vmatpush2.msra.mxu0 0.0
    %917 = vmatprep.subr.mxu0 0.0
    %918 = vmatpush2.msra.mxu0 0.0
    %919 = vmatprep.subr.mxu0 0.0
    %920 = vmatpush2.msra.mxu0 0.0
    %921 = vmatprep.subr.mxu0 0.0
    %922 = vmatpush2.msra.mxu0 0.0
    %923 = vmatprep.subr.mxu0 0.0
    %924 = vmatpush2.msra.mxu0 0.0
    %925 = vmatprep.subr.mxu0 0.0
    %926 = vmatpush2.msra.mxu0 0.0
    %927 = vmatprep.subr.mxu0 0.0
    %928 = vmatpush2.msra.mxu0 0.0
    %929 = vmatprep.subr.mxu0 0.0
    %930 = vmatpush2.msra.mxu0 0.0
    %931 = vmatprep.subr.mxu0 0.0
    %932 = vmatpush2.msra.mxu0 0.0
    %933 = vmatprep.subr.mxu0 0.0
    %934 = vmatpush2.msra.mxu0 0.0
    %935 = vmatprep.subr.mxu0 0.0
    %936 = vmatpush2.msra.mxu0 0.0
    %937 = vmatprep.mubr.f32.mxu0 0.0
    %938 = vmatmul.mubr.f32.gmra.mxu0 %v871
    %v939 = vpop.f32.mrf.mxu0
    %v940 = vadd.f32 %v284, %v939
    %v941 = vpop.f32.mrf.mxu0
    %942 = vdwg.mxu0
    %v943 = vtanh.pop %v940
    %v944 = vmul.f32 %v943, %v118
    %v945 = vadd.f32 %v944, %v119
    %v946 = vmul.f32 %v945, %v761
    %948 = vrot.lane.b32.xlu0 %v945, 64
    %v949 = vpop.permute.xlu0 %948
    %v951 = vmul.f32 %v945, %v949
    %953 = vrot.lane.b32.xlu0 %v951, 32
    %v954 = vpop.permute.xlu0 %953
    %v956 = vadd.f32 %v946, %v954
    %v957 = vtanh.pop %v956
    %959 = vrot.lane.b32.xlu0 %v957, 64
    %v960 = vpop.permute.xlu0 %959
    %v962 = vmul.f32 %v945, %v960
    %964 = vrot.lane.b32.xlu0 %v863, 32
    %v965 = vpop.permute.xlu0 %964
    %v966 = vsel %vm286, %v965, 0
    %968 = vmatprep.subr.mxu0 0.0
    %969 = vmatpush1.msra.mxu0 0.0
    %970 = vmatprep.subr.mxu0 0.0
    %971 = vmatpush1.msra.mxu0 0.0
    %972 = vmatprep.subr.mxu0 0.0
    %973 = vmatpush1.msra.mxu0 0.0
    %974 = vmatprep.subr.mxu0 0.0
    %975 = vmatpush1.msra.mxu0 0.0
    %976 = vmatprep.subr.mxu0 0.0
    %977 = vmatpush1.msra.mxu0 0.0
    %978 = vmatprep.subr.mxu0 0.0
    %979 = vmatpush1.msra.mxu0 0.0
    %980 = vmatprep.subr.mxu0 0.0
    %981 = vmatpush1.msra.mxu0 0.0
    %982 = vmatprep.subr.mxu0 0.0
    %983 = vmatpush1.msra.mxu0 0.0
    %984 = vmatprep.subr.mxu0 0.0
    %985 = vmatpush1.msra.mxu0 0.0
    %986 = vmatprep.subr.mxu0 0.0
    %987 = vmatpush1.msra.mxu0 0.0
    %988 = vmatprep.subr.mxu0 0.0
    %989 = vmatpush1.msra.mxu0 0.0
    %990 = vmatprep.subr.mxu0 0.0
    %991 = vmatpush1.msra.mxu0 0.0
    %992 = vmatprep.subr.mxu0 0.0
    %993 = vmatpush1.msra.mxu0 %v270
    %994 = vmatprep.subr.mxu0 0.0
    %995 = vmatpush1.msra.mxu0 %v269
    %996 = vmatprep.subr.mxu0 0.0
    %997 = vmatpush1.msra.mxu0 %v268
    %998 = vmatprep.subr.mxu0 0.0
    %999 = vmatpush1.msra.mxu0 %v267
    %1000 = vmatprep.subr.mxu0 0.0
    %1001 = vmatpush2.msra.mxu0 0.0
    %1002 = vmatprep.subr.mxu0 0.0
    %1003 = vmatpush2.msra.mxu0 0.0
    %1004 = vmatprep.subr.mxu0 0.0
    %1005 = vmatpush2.msra.mxu0 0.0
    %1006 = vmatprep.subr.mxu0 0.0
    %1007 = vmatpush2.msra.mxu0 0.0
    %1008 = vmatprep.subr.mxu0 0.0
    %1009 = vmatpush2.msra.mxu0 0.0
    %1010 = vmatprep.subr.mxu0 0.0
    %1011 = vmatpush2.msra.mxu0 0.0
    %1012 = vmatprep.subr.mxu0 0.0
    %1013 = vmatpush2.msra.mxu0 0.0
    %1014 = vmatprep.subr.mxu0 0.0
    %1015 = vmatpush2.msra.mxu0 0.0
    %1016 = vmatprep.subr.mxu0 0.0
    %1017 = vmatpush2.msra.mxu0 0.0
    %1018 = vmatprep.subr.mxu0 0.0
    %1019 = vmatpush2.msra.mxu0 0.0
    %1020 = vmatprep.subr.mxu0 0.0
    %1021 = vmatpush2.msra.mxu0 0.0
    %1022 = vmatprep.subr.mxu0 0.0
    %1023 = vmatpush2.msra.mxu0 0.0
    %1024 = vmatprep.subr.mxu0 0.0
    %1025 = vmatpush2.msra.mxu0 0.0
    %1026 = vmatprep.subr.mxu0 0.0
    %1027 = vmatpush2.msra.mxu0 0.0
    %1028 = vmatprep.subr.mxu0 0.0
    %1029 = vmatpush2.msra.mxu0 0.0
    %1030 = vmatprep.subr.mxu0 0.0
    %1031 = vmatpush2.msra.mxu0 0.0
    %1032 = vmatprep.mubr.f32.mxu0 0.0
    %1033 = vmatmul.mubr.f32.gmra.mxu0 %v966
    %v1034 = vpop.f32.mrf.mxu0
    %v1035 = vadd.f32 0.0, %v1034
    %v1036 = vpop.f32.mrf.mxu0
    %1037 = vdwg.mxu0
    %v1038 = vadd.f32 %v249, %v1035
    %v1039 = vtanh.pop %v1038
    %v1040 = vmul.f32 %v1039, %v118
    %v1041 = vadd.f32 %v1040, %v119
    %v1042 = vmul.f32 %v1041, %v857
    %1044 = vrot.lane.b32.xlu0 %v1041, 64
    %v1045 = vpop.permute.xlu0 %1044
    %v1047 = vmul.f32 %v1041, %v1045
    %1049 = vrot.lane.b32.xlu0 %v1047, 32
    %v1050 = vpop.permute.xlu0 %1049
    %v1052 = vadd.f32 %v1042, %v1050
    %v1053 = vtanh.pop %v1052
    %1055 = vrot.lane.b32.xlu0 %v1053, 64
    %v1056 = vpop.permute.xlu0 %1055
    %v1058 = vmul.f32 %v1041, %v1056
    %1061 = vrot.lane.b32.xlu0 %v962, 64
    %v1062 = vpop.permute.xlu0 %1061
    %v1064 = vsel %vm286, %v965, %v1062
    %v1066 = vsel %vm479, %v1064, 0
    %1068 = vmatprep.subr.mxu0 0.0
    %1069 = vmatpush1.msra.mxu0 0.0
    %1070 = vmatprep.subr.mxu0 0.0
    %1071 = vmatpush1.msra.mxu0 0.0
    %1072 = vmatprep.subr.mxu0 0.0
    %1073 = vmatpush1.msra.mxu0 0.0
    %1074 = vmatprep.subr.mxu0 0.0
    %1075 = vmatpush1.msra.mxu0 0.0
    %1076 = vmatprep.subr.mxu0 0.0
    %1077 = vmatpush1.msra.mxu0 0.0
    %1078 = vmatprep.subr.mxu0 0.0
    %1079 = vmatpush1.msra.mxu0 0.0
    %1080 = vmatprep.subr.mxu0 0.0
    %1081 = vmatpush1.msra.mxu0 0.0
    %1082 = vmatprep.subr.mxu0 0.0
    %1083 = vmatpush1.msra.mxu0 0.0
    %1084 = vmatprep.subr.mxu0 0.0
    %1085 = vmatpush1.msra.mxu0 %v278
    %1086 = vmatprep.subr.mxu0 0.0
    %1087 = vmatpush1.msra.mxu0 %v277
    %1088 = vmatprep.subr.mxu0 0.0
    %1089 = vmatpush1.msra.mxu0 %v276
    %1090 = vmatprep.subr.mxu0 0.0
    %1091 = vmatpush1.msra.mxu0 %v275
    %1092 = vmatprep.subr.mxu0 0.0
    %1093 = vmatpush1.msra.mxu0 %v274
    %1094 = vmatprep.subr.mxu0 0.0
    %1095 = vmatpush1.msra.mxu0 %v273
    %1096 = vmatprep.subr.mxu0 0.0
    %1097 = vmatpush1.msra.mxu0 %v272
    %1098 = vmatprep.subr.mxu0 0.0
    %1099 = vmatpush1.msra.mxu0 %v271
    %1100 = vmatprep.subr.mxu0 0.0
    %1101 = vmatpush2.msra.mxu0 0.0
    %1102 = vmatprep.subr.mxu0 0.0
    %1103 = vmatpush2.msra.mxu0 0.0
    %1104 = vmatprep.subr.mxu0 0.0
    %1105 = vmatpush2.msra.mxu0 0.0
    %1106 = vmatprep.subr.mxu0 0.0
    %1107 = vmatpush2.msra.mxu0 0.0
    %1108 = vmatprep.subr.mxu0 0.0
    %1109 = vmatpush2.msra.mxu0 0.0
    %1110 = vmatprep.subr.mxu0 0.0
    %1111 = vmatpush2.msra.mxu0 0.0
    %1112 = vmatprep.subr.mxu0 0.0
    %1113 = vmatpush2.msra.mxu0 0.0
    %1114 = vmatprep.subr.mxu0 0.0
    %1115 = vmatpush2.msra.mxu0 0.0
    %1116 = vmatprep.subr.mxu0 0.0
    %1117 = vmatpush2.msra.mxu0 0.0
    %1118 = vmatprep.subr.mxu0 0.0
    %1119 = vmatpush2.msra.mxu0 0.0
    %1120 = vmatprep.subr.mxu0 0.0
    %1121 = vmatpush2.msra.mxu0 0.0
    %1122 = vmatprep.subr.mxu0 0.0
    %1123 = vmatpush2.msra.mxu0 0.0
    %1124 = vmatprep.subr.mxu0 0.0
    %1125 = vmatpush2.msra.mxu0 0.0
    %1126 = vmatprep.subr.mxu0 0.0
    %1127 = vmatpush2.msra.mxu0 0.0
    %1128 = vmatprep.subr.mxu0 0.0
    %1129 = vmatpush2.msra.mxu0 0.0
    %1130 = vmatprep.subr.mxu0 0.0
    %1131 = vmatpush2.msra.mxu0 0.0
    %1132 = vmatprep.mubr.f32.mxu0 0.0
    %1133 = vmatmul.mubr.f32.gmra.mxu0 %v1066
    %v1134 = vpop.f32.mrf.mxu0
    %v1135 = vadd.f32 %v284, %v1134
    %v1136 = vpop.f32.mrf.mxu0
    %1137 = vdwg.mxu0
    %v1138 = vtanh.pop %v1135
    %v1139 = vmul.f32 %v1138, %v118
    %v1140 = vadd.f32 %v1139, %v119
    %v1141 = vmul.f32 %v1140, %v956
    %1143 = vrot.lane.b32.xlu0 %v1140, 64
    %v1144 = vpop.permute.xlu0 %1143
    %v1146 = vmul.f32 %v1140, %v1144
    %1148 = vrot.lane.b32.xlu0 %v1146, 32
    %v1149 = vpop.permute.xlu0 %1148
    %v1151 = vadd.f32 %v1141, %v1149
    %v1152 = vtanh.pop %v1151
    %1154 = vrot.lane.b32.xlu0 %v1152, 64
    %v1155 = vpop.permute.xlu0 %1154
    %v1157 = vmul.f32 %v1140, %v1155
    %1159 = vrot.lane.b32.xlu0 %v1058, 32
    %v1160 = vpop.permute.xlu0 %1159
    %v1161 = vsel %vm286, %v1160, 0
    %1163 = vmatprep.subr.mxu0 0.0
    %1164 = vmatpush1.msra.mxu0 0.0
    %1165 = vmatprep.subr.mxu0 0.0
    %1166 = vmatpush1.msra.mxu0 0.0
    %1167 = vmatprep.subr.mxu0 0.0
    %1168 = vmatpush1.msra.mxu0 0.0
    %1169 = vmatprep.subr.mxu0 0.0
    %1170 = vmatpush1.msra.mxu0 0.0
    %1171 = vmatprep.subr.mxu0 0.0
    %1172 = vmatpush1.msra.mxu0 0.0
    %1173 = vmatprep.subr.mxu0 0.0
    %1174 = vmatpush1.msra.mxu0 0.0
    %1175 = vmatprep.subr.mxu0 0.0
    %1176 = vmatpush1.msra.mxu0 0.0
    %1177 = vmatprep.subr.mxu0 0.0
    %1178 = vmatpush1.msra.mxu0 0.0
    %1179 = vmatprep.subr.mxu0 0.0
    %1180 = vmatpush1.msra.mxu0 0.0
    %1181 = vmatprep.subr.mxu0 0.0
    %1182 = vmatpush1.msra.mxu0 0.0
    %1183 = vmatprep.subr.mxu0 0.0
    %1184 = vmatpush1.msra.mxu0 0.0
    %1185 = vmatprep.subr.mxu0 0.0
    %1186 = vmatpush1.msra.mxu0 0.0
    %1187 = vmatprep.subr.mxu0 0.0
    %1188 = vmatpush1.msra.mxu0 %v270
    %1189 = vmatprep.subr.mxu0 0.0
    %1190 = vmatpush1.msra.mxu0 %v269
    %1191 = vmatprep.subr.mxu0 0.0
    %1192 = vmatpush1.msra.mxu0 %v268
    %1193 = vmatprep.subr.mxu0 0.0
    %1194 = vmatpush1.msra.mxu0 %v267
    %1195 = vmatprep.subr.mxu0 0.0
    %1196 = vmatpush2.msra.mxu0 0.0
    %1197 = vmatprep.subr.mxu0 0.0
    %1198 = vmatpush2.msra.mxu0 0.0
    %1199 = vmatprep.subr.mxu0 0.0
    %1200 = vmatpush2.msra.mxu0 0.0
    %1201 = vmatprep.subr.mxu0 0.0
    %1202 = vmatpush2.msra.mxu0 0.0
    %1203 = vmatprep.subr.mxu0 0.0
    %1204 = vmatpush2.msra.mxu0 0.0
    %1205 = vmatprep.subr.mxu0 0.0
    %1206 = vmatpush2.msra.mxu0 0.0
    %1207 = vmatprep.subr.mxu0 0.0
    %1208 = vmatpush2.msra.mxu0 0.0
    %1209 = vmatprep.subr.mxu0 0.0
    %1210 = vmatpush2.msra.mxu0 0.0
    %1211 = vmatprep.subr.mxu0 0.0
    %1212 = vmatpush2.msra.mxu0 0.0
    %1213 = vmatprep.subr.mxu0 0.0
    %1214 = vmatpush2.msra.mxu0 0.0
    %1215 = vmatprep.subr.mxu0 0.0
    %1216 = vmatpush2.msra.mxu0 0.0
    %1217 = vmatprep.subr.mxu0 0.0
    %1218 = vmatpush2.msra.mxu0 0.0
    %1219 = vmatprep.subr.mxu0 0.0
    %1220 = vmatpush2.msra.mxu0 0.0
    %1221 = vmatprep.subr.mxu0 0.0
    %1222 = vmatpush2.msra.mxu0 0.0
    %1223 = vmatprep.subr.mxu0 0.0
    %1224 = vmatpush2.msra.mxu0 0.0
    %1225 = vmatprep.subr.mxu0 0.0
    %1226 = vmatpush2.msra.mxu0 0.0
    %1227 = vmatprep.mubr.f32.mxu0 0.0
    %1228 = vmatmul.mubr.f32.gmra.mxu0 %v1161
    %v1229 = vpop.f32.mrf.mxu0
    %v1230 = vadd.f32 0.0, %v1229
    %v1231 = vpop.f32.mrf.mxu0
    %1232 = vdwg.mxu0
    %v1233 = vadd.f32 %v254, %v1230
    %v1234 = vtanh.pop %v1233
    %v1235 = vmul.f32 %v1234, %v118
    %v1236 = vadd.f32 %v1235, %v119
    %v1237 = vmul.f32 %v1236, %v1052
    %1239 = vrot.lane.b32.xlu0 %v1236, 64
    %v1240 = vpop.permute.xlu0 %1239
    %v1242 = vmul.f32 %v1236, %v1240
    %1244 = vrot.lane.b32.xlu0 %v1242, 32
    %v1245 = vpop.permute.xlu0 %1244
    %v1247 = vadd.f32 %v1237, %v1245
    %v1248 = vtanh.pop %v1247
    %1250 = vrot.lane.b32.xlu0 %v1248, 64
    %v1251 = vpop.permute.xlu0 %1250
    %v1253 = vmul.f32 %v1236, %v1251
    %1256 = vrot.lane.b32.xlu0 %v1157, 64
    %v1257 = vpop.permute.xlu0 %1256
    %v1259 = vsel %vm286, %v1160, %v1257
    %v1261 = vsel %vm479, %v1259, 0
    %1263 = vmatprep.subr.mxu0 0.0
    %1264 = vmatpush1.msra.mxu0 0.0
    %1265 = vmatprep.subr.mxu0 0.0
    %1266 = vmatpush1.msra.mxu0 0.0
    %1267 = vmatprep.subr.mxu0 0.0
    %1268 = vmatpush1.msra.mxu0 0.0
    %1269 = vmatprep.subr.mxu0 0.0
    %1270 = vmatpush1.msra.mxu0 0.0
    %1271 = vmatprep.subr.mxu0 0.0
    %1272 = vmatpush1.msra.mxu0 0.0
    %1273 = vmatprep.subr.mxu0 0.0
    %1274 = vmatpush1.msra.mxu0 0.0
    %1275 = vmatprep.subr.mxu0 0.0
    %1276 = vmatpush1.msra.mxu0 0.0
    %1277 = vmatprep.subr.mxu0 0.0
    %1278 = vmatpush1.msra.mxu0 0.0
    %1279 = vmatprep.subr.mxu0 0.0
    %1280 = vmatpush1.msra.mxu0 %v278
    %1281 = vmatprep.subr.mxu0 0.0
    %1282 = vmatpush1.msra.mxu0 %v277
    %1283 = vmatprep.subr.mxu0 0.0
    %1284 = vmatpush1.msra.mxu0 %v276
    %1285 = vmatprep.subr.mxu0 0.0
    %1286 = vmatpush1.msra.mxu0 %v275
    %1287 = vmatprep.subr.mxu0 0.0
    %1288 = vmatpush1.msra.mxu0 %v274
    %1289 = vmatprep.subr.mxu0 0.0
    %1290 = vmatpush1.msra.mxu0 %v273
    %1291 = vmatprep.subr.mxu0 0.0
    %1292 = vmatpush1.msra.mxu0 %v272
    %1293 = vmatprep.subr.mxu0 0.0
    %1294 = vmatpush1.msra.mxu0 %v271
    %1295 = vmatprep.subr.mxu0 0.0
    %1296 = vmatpush2.msra.mxu0 0.0
    %1297 = vmatprep.subr.mxu0 0.0
    %1298 = vmatpush2.msra.mxu0 0.0
    %1299 = vmatprep.subr.mxu0 0.0
    %1300 = vmatpush2.msra.mxu0 0.0
    %1301 = vmatprep.subr.mxu0 0.0
    %1302 = vmatpush2.msra.mxu0 0.0
    %1303 = vmatprep.subr.mxu0 0.0
    %1304 = vmatpush2.msra.mxu0 0.0
    %1305 = vmatprep.subr.mxu0 0.0
    %1306 = vmatpush2.msra.mxu0 0.0
    %1307 = vmatprep.subr.mxu0 0.0
    %1308 = vmatpush2.msra.mxu0 0.0
    %1309 = vmatprep.subr.mxu0 0.0
    %1310 = vmatpush2.msra.mxu0 0.0
    %1311 = vmatprep.subr.mxu0 0.0
    %1312 = vmatpush2.msra.mxu0 0.0
    %1313 = vmatprep.subr.mxu0 0.0
    %1314 = vmatpush2.msra.mxu0 0.0
    %1315 = vmatprep.subr.mxu0 0.0
    %1316 = vmatpush2.msra.mxu0 0.0
    %1317 = vmatprep.subr.mxu0 0.0
    %1318 = vmatpush2.msra.mxu0 0.0
    %1319 = vmatprep.subr.mxu0 0.0
    %1320 = vmatpush2.msra.mxu0 0.0
    %1321 = vmatprep.subr.mxu0 0.0
    %1322 = vmatpush2.msra.mxu0 0.0
    %1323 = vmatprep.subr.mxu0 0.0
    %1324 = vmatpush2.msra.mxu0 0.0
    %1325 = vmatprep.subr.mxu0 0.0
    %1326 = vmatpush2.msra.mxu0 0.0
    %1327 = vmatprep.mubr.f32.mxu0 0.0
    %1328 = vmatmul.mubr.f32.gmra.mxu0 %v1261
    %v1329 = vpop.f32.mrf.mxu0
    %v1330 = vadd.f32 %v284, %v1329
    %v1331 = vpop.f32.mrf.mxu0
    %1332 = vdwg.mxu0
    %v1333 = vtanh.pop %v1330
    %v1334 = vmul.f32 %v1333, %v118
    %v1335 = vadd.f32 %v1334, %v119
    %v1336 = vmul.f32 %v1335, %v1151
    %1338 = vrot.lane.b32.xlu0 %v1335, 64
    %v1339 = vpop.permute.xlu0 %1338
    %v1341 = vmul.f32 %v1335, %v1339
    %1343 = vrot.lane.b32.xlu0 %v1341, 32
    %v1344 = vpop.permute.xlu0 %1343
    %v1346 = vadd.f32 %v1336, %v1344
    %v1347 = vtanh.pop %v1346
    %1349 = vrot.lane.b32.xlu0 %v1347, 64
    %v1350 = vpop.permute.xlu0 %1349
    %v1352 = vmul.f32 %v1335, %v1350
    %1354 = vrot.lane.b32.xlu0 %v1253, 32
    %v1355 = vpop.permute.xlu0 %1354
    %v1356 = vsel %vm286, %v1355, 0
    %1358 = vmatprep.subr.mxu0 0.0
    %1359 = vmatpush1.msra.mxu0 0.0
    %1360 = vmatprep.subr.mxu0 0.0
    %1361 = vmatpush1.msra.mxu0 0.0
    %1362 = vmatprep.subr.mxu0 0.0
    %1363 = vmatpush1.msra.mxu0 0.0
    %1364 = vmatprep.subr.mxu0 0.0
    %1365 = vmatpush1.msra.mxu0 0.0
    %1366 = vmatprep.subr.mxu0 0.0
    %1367 = vmatpush1.msra.mxu0 0.0
    %1368 = vmatprep.subr.mxu0 0.0
    %1369 = vmatpush1.msra.mxu0 0.0
    %1370 = vmatprep.subr.mxu0 0.0
    %1371 = vmatpush1.msra.mxu0 0.0
    %1372 = vmatprep.subr.mxu0 0.0
    %1373 = vmatpush1.msra.mxu0 0.0
    %1374 = vmatprep.subr.mxu0 0.0
    %1375 = vmatpush1.msra.mxu0 0.0
    %1376 = vmatprep.subr.mxu0 0.0
    %1377 = vmatpush1.msra.mxu0 0.0
    %1378 = vmatprep.subr.mxu0 0.0
    %1379 = vmatpush1.msra.mxu0 0.0
    %1380 = vmatprep.subr.mxu0 0.0
    %1381 = vmatpush1.msra.mxu0 0.0
    %1382 = vmatprep.subr.mxu0 0.0
    %1383 = vmatpush1.msra.mxu0 %v270
    %1384 = vmatprep.subr.mxu0 0.0
    %1385 = vmatpush1.msra.mxu0 %v269
    %1386 = vmatprep.subr.mxu0 0.0
    %1387 = vmatpush1.msra.mxu0 %v268
    %1388 = vmatprep.subr.mxu0 0.0
    %1389 = vmatpush1.msra.mxu0 %v267
    %1390 = vmatprep.subr.mxu0 0.0
    %1391 = vmatpush2.msra.mxu0 0.0
    %1392 = vmatprep.subr.mxu0 0.0
    %1393 = vmatpush2.msra.mxu0 0.0
    %1394 = vmatprep.subr.mxu0 0.0
    %1395 = vmatpush2.msra.mxu0 0.0
    %1396 = vmatprep.subr.mxu0 0.0
    %1397 = vmatpush2.msra.mxu0 0.0
    %1398 = vmatprep.subr.mxu0 0.0
    %1399 = vmatpush2.msra.mxu0 0.0
    %1400 = vmatprep.subr.mxu0 0.0
    %1401 = vmatpush2.msra.mxu0 0.0
    %1402 = vmatprep.subr.mxu0 0.0
    %1403 = vmatpush2.msra.mxu0 0.0
    %1404 = vmatprep.subr.mxu0 0.0
    %1405 = vmatpush2.msra.mxu0 0.0
    %1406 = vmatprep.subr.mxu0 0.0
    %1407 = vmatpush2.msra.mxu0 0.0
    %1408 = vmatprep.subr.mxu0 0.0
    %1409 = vmatpush2.msra.mxu0 0.0
    %1410 = vmatprep.subr.mxu0 0.0
    %1411 = vmatpush2.msra.mxu0 0.0
    %1412 = vmatprep.subr.mxu0 0.0
    %1413 = vmatpush2.msra.mxu0 0.0
    %1414 = vmatprep.subr.mxu0 0.0
    %1415 = vmatpush2.msra.mxu0 0.0
    %1416 = vmatprep.subr.mxu0 0.0
    %1417 = vmatpush2.msra.mxu0 0.0
    %1418 = vmatprep.subr.mxu0 0.0
    %1419 = vmatpush2.msra.mxu0 0.0
    %1420 = vmatprep.subr.mxu0 0.0
    %1421 = vmatpush2.msra.mxu0 0.0
    %1422 = vmatprep.mubr.f32.mxu0 0.0
    %1423 = vmatmul.mubr.f32.gmra.mxu0 %v1356
    %v1424 = vpop.f32.mrf.mxu0
    %v1425 = vadd.f32 0.0, %v1424
    %v1426 = vpop.f32.mrf.mxu0
    %1427 = vdwg.mxu0
    %v1428 = vadd.f32 %v259, %v1425
    %v1429 = vtanh.pop %v1428
    %v1430 = vmul.f32 %v1429, %v118
    %v1431 = vadd.f32 %v1430, %v119
    %v1432 = vmul.f32 %v1431, %v1247
    %1434 = vrot.lane.b32.xlu0 %v1431, 64
    %v1435 = vpop.permute.xlu0 %1434
    %v1437 = vmul.f32 %v1431, %v1435
    %1439 = vrot.lane.b32.xlu0 %v1437, 32
    %v1440 = vpop.permute.xlu0 %1439
    %v1442 = vadd.f32 %v1432, %v1440
    %v1443 = vtanh.pop %v1442
    %1445 = vrot.lane.b32.xlu0 %v1443, 64
    %v1446 = vpop.permute.xlu0 %1445
    %v1448 = vmul.f32 %v1431, %v1446
    %1451 = vrot.lane.b32.xlu0 %v1352, 64
    %v1452 = vpop.permute.xlu0 %1451
    %v1454 = vsel %vm286, %v1355, %v1452
    %v1456 = vsel %vm479, %v1454, 0
    %1458 = vmatprep.subr.mxu0 0.0
    %1459 = vmatpush1.msra.mxu0 0.0
    %1460 = vmatprep.subr.mxu0 0.0
    %1461 = vmatpush1.msra.mxu0 0.0
    %1462 = vmatprep.subr.mxu0 0.0
    %1463 = vmatpush1.msra.mxu0 0.0
    %1464 = vmatprep.subr.mxu0 0.0
    %1465 = vmatpush1.msra.mxu0 0.0
    %1466 = vmatprep.subr.mxu0 0.0
    %1467 = vmatpush1.msra.mxu0 0.0
    %1468 = vmatprep.subr.mxu0 0.0
    %1469 = vmatpush1.msra.mxu0 0.0
    %1470 = vmatprep.subr.mxu0 0.0
    %1471 = vmatpush1.msra.mxu0 0.0
    %1472 = vmatprep.subr.mxu0 0.0
    %1473 = vmatpush1.msra.mxu0 0.0
    %1474 = vmatprep.subr.mxu0 0.0
    %1475 = vmatpush1.msra.mxu0 %v278
    %1476 = vmatprep.subr.mxu0 0.0
    %1477 = vmatpush1.msra.mxu0 %v277
    %1478 = vmatprep.subr.mxu0 0.0
    %1479 = vmatpush1.msra.mxu0 %v276
    %1480 = vmatprep.subr.mxu0 0.0
    %1481 = vmatpush1.msra.mxu0 %v275
    %1482 = vmatprep.subr.mxu0 0.0
    %1483 = vmatpush1.msra.mxu0 %v274
    %1484 = vmatprep.subr.mxu0 0.0
    %1485 = vmatpush1.msra.mxu0 %v273
    %1486 = vmatprep.subr.mxu0 0.0
    %1487 = vmatpush1.msra.mxu0 %v272
    %1488 = vmatprep.subr.mxu0 0.0
    %1489 = vmatpush1.msra.mxu0 %v271
    %1490 = vmatprep.subr.mxu0 0.0
    %1491 = vmatpush2.msra.mxu0 0.0
    %1492 = vmatprep.subr.mxu0 0.0
    %1493 = vmatpush2.msra.mxu0 0.0
    %1494 = vmatprep.subr.mxu0 0.0
    %1495 = vmatpush2.msra.mxu0 0.0
    %1496 = vmatprep.subr.mxu0 0.0
    %1497 = vmatpush2.msra.mxu0 0.0
    %1498 = vmatprep.subr.mxu0 0.0
    %1499 = vmatpush2.msra.mxu0 0.0
    %1500 = vmatprep.subr.mxu0 0.0
    %1501 = vmatpush2.msra.mxu0 0.0
    %1502 = vmatprep.subr.mxu0 0.0
    %1503 = vmatpush2.msra.mxu0 0.0
    %1504 = vmatprep.subr.mxu0 0.0
    %1505 = vmatpush2.msra.mxu0 0.0
    %1506 = vmatprep.subr.mxu0 0.0
    %1507 = vmatpush2.msra.mxu0 0.0
    %1508 = vmatprep.subr.mxu0 0.0
    %1509 = vmatpush2.msra.mxu0 0.0
    %1510 = vmatprep.subr.mxu0 0.0
    %1511 = vmatpush2.msra.mxu0 0.0
    %1512 = vmatprep.subr.mxu0 0.0
    %1513 = vmatpush2.msra.mxu0 0.0
    %1514 = vmatprep.subr.mxu0 0.0
    %1515 = vmatpush2.msra.mxu0 0.0
    %1516 = vmatprep.subr.mxu0 0.0
    %1517 = vmatpush2.msra.mxu0 0.0
    %1518 = vmatprep.subr.mxu0 0.0
    %1519 = vmatpush2.msra.mxu0 0.0
    %1520 = vmatprep.subr.mxu0 0.0
    %1521 = vmatpush2.msra.mxu0 0.0
    %1522 = vmatprep.mubr.f32.mxu0 0.0
    %1523 = vmatmul.mubr.f32.gmra.mxu0 %v1456
    %v1524 = vpop.f32.mrf.mxu0
    %v1525 = vadd.f32 %v284, %v1524
    %v1526 = vpop.f32.mrf.mxu0
    %1527 = vdwg.mxu0
    %v1528 = vtanh.pop %v1525
    %v1529 = vmul.f32 %v1528, %v118
    %v1530 = vadd.f32 %v1529, %v119
    %v1531 = vmul.f32 %v1530, %v1346
    %1533 = vrot.lane.b32.xlu0 %v1530, 64
    %v1534 = vpop.permute.xlu0 %1533
    %v1536 = vmul.f32 %v1530, %v1534
    %1538 = vrot.lane.b32.xlu0 %v1536, 32
    %v1539 = vpop.permute.xlu0 %1538
    %v1541 = vadd.f32 %v1531, %v1539
    %v1542 = vtanh.pop %v1541
    %1544 = vrot.lane.b32.xlu0 %v1542, 64
    %v1545 = vpop.permute.xlu0 %1544
    %v1547 = vmul.f32 %v1530, %v1545
    %1549 = vrot.lane.b32.xlu0 %v1448, 32
    %v1550 = vpop.permute.xlu0 %1549
    %v1551 = vsel %vm286, %v1550, 0
    %1553 = vmatprep.subr.mxu0 0.0
    %1554 = vmatpush1.msra.mxu0 0.0
    %1555 = vmatprep.subr.mxu0 0.0
    %1556 = vmatpush1.msra.mxu0 0.0
    %1557 = vmatprep.subr.mxu0 0.0
    %1558 = vmatpush1.msra.mxu0 0.0
    %1559 = vmatprep.subr.mxu0 0.0
    %1560 = vmatpush1.msra.mxu0 0.0
    %1561 = vmatprep.subr.mxu0 0.0
    %1562 = vmatpush1.msra.mxu0 0.0
    %1563 = vmatprep.subr.mxu0 0.0
    %1564 = vmatpush1.msra.mxu0 0.0
    %1565 = vmatprep.subr.mxu0 0.0
    %1566 = vmatpush1.msra.mxu0 0.0
    %1567 = vmatprep.subr.mxu0 0.0
    %1568 = vmatpush1.msra.mxu0 0.0
    %1569 = vmatprep.subr.mxu0 0.0
    %1570 = vmatpush1.msra.mxu0 0.0
    %1571 = vmatprep.subr.mxu0 0.0
    %1572 = vmatpush1.msra.mxu0 0.0
    %1573 = vmatprep.subr.mxu0 0.0
    %1574 = vmatpush1.msra.mxu0 0.0
    %1575 = vmatprep.subr.mxu0 0.0
    %1576 = vmatpush1.msra.mxu0 0.0
    %1577 = vmatprep.subr.mxu0 0.0
    %1578 = vmatpush1.msra.mxu0 %v270
    %1579 = vmatprep.subr.mxu0 0.0
    %1580 = vmatpush1.msra.mxu0 %v269
    %1581 = vmatprep.subr.mxu0 0.0
    %1582 = vmatpush1.msra.mxu0 %v268
    %1583 = vmatprep.subr.mxu0 0.0
    %1584 = vmatpush1.msra.mxu0 %v267
    %1585 = vmatprep.subr.mxu0 0.0
    %1586 = vmatpush2.msra.mxu0 0.0
    %1587 = vmatprep.subr.mxu0 0.0
    %1588 = vmatpush2.msra.mxu0 0.0
    %1589 = vmatprep.subr.mxu0 0.0
    %1590 = vmatpush2.msra.mxu0 0.0
    %1591 = vmatprep.subr.mxu0 0.0
    %1592 = vmatpush2.msra.mxu0 0.0
    %1593 = vmatprep.subr.mxu0 0.0
    %1594 = vmatpush2.msra.mxu0 0.0
    %1595 = vmatprep.subr.mxu0 0.0
    %1596 = vmatpush2.msra.mxu0 0.0
    %1597 = vmatprep.subr.mxu0 0.0
    %1598 = vmatpush2.msra.mxu0 0.0
    %1599 = vmatprep.subr.mxu0 0.0
    %1600 = vmatpush2.msra.mxu0 0.0
    %1601 = vmatprep.subr.mxu0 0.0
    %1602 = vmatpush2.msra.mxu0 0.0
    %1603 = vmatprep.subr.mxu0 0.0
    %1604 = vmatpush2.msra.mxu0 0.0
    %1605 = vmatprep.subr.mxu0 0.0
    %1606 = vmatpush2.msra.mxu0 0.0
    %1607 = vmatprep.subr.mxu0 0.0
    %1608 = vmatpush2.msra.mxu0 0.0
    %1609 = vmatprep.subr.mxu0 0.0
    %1610 = vmatpush2.msra.mxu0 0.0
    %1611 = vmatprep.subr.mxu0 0.0
    %1612 = vmatpush2.msra.mxu0 0.0
    %1613 = vmatprep.subr.mxu0 0.0
    %1614 = vmatpush2.msra.mxu0 0.0
    %1615 = vmatprep.subr.mxu0 0.0
    %1616 = vmatpush2.msra.mxu0 0.0
    %1617 = vmatprep.mubr.f32.mxu0 0.0
    %1618 = vmatmul.mubr.f32.gmra.mxu0 %v1551
    %v1619 = vpop.f32.mrf.mxu0
    %v1620 = vadd.f32 0.0, %v1619
    %v1621 = vpop.f32.mrf.mxu0
    %1622 = vdwg.mxu0
    %v1623 = vadd.f32 %v264, %v1620
    %v1624 = vtanh.pop %v1623
    %v1625 = vmul.f32 %v1624, %v118
    %v1626 = vadd.f32 %v1625, %v119
    %v1627 = vmul.f32 %v1626, %v1442
    %1629 = vrot.lane.b32.xlu0 %v1626, 64
    %v1630 = vpop.permute.xlu0 %1629
    %v1632 = vmul.f32 %v1626, %v1630
    %1634 = vrot.lane.b32.xlu0 %v1632, 32
    %v1635 = vpop.permute.xlu0 %1634
    %v1637 = vadd.f32 %v1627, %v1635
    %v1638 = vtanh.pop %v1637
    %1640 = vrot.lane.b32.xlu0 %v1638, 64
    %v1641 = vpop.permute.xlu0 %1640
    %v1643 = vmul.f32 %v1626, %v1641
    %1646 = vrot.lane.b32.xlu0 %v1547, 64
    %v1647 = vpop.permute.xlu0 %1646
    %v1649 = vsel %vm286, %v1550, %v1647
    %v1651 = vsel %vm479, %v1649, 0
    %1653 = vmatprep.subr.mxu0 0.0
    %1654 = vmatpush1.msra.mxu0 0.0
    %1655 = vmatprep.subr.mxu0 0.0
    %1656 = vmatpush1.msra.mxu0 0.0
    %1657 = vmatprep.subr.mxu0 0.0
    %1658 = vmatpush1.msra.mxu0 0.0
    %1659 = vmatprep.subr.mxu0 0.0
    %1660 = vmatpush1.msra.mxu0 0.0
    %1661 = vmatprep.subr.mxu0 0.0
    %1662 = vmatpush1.msra.mxu0 0.0
    %1663 = vmatprep.subr.mxu0 0.0
    %1664 = vmatpush1.msra.mxu0 0.0
    %1665 = vmatprep.subr.mxu0 0.0
    %1666 = vmatpush1.msra.mxu0 0.0
    %1667 = vmatprep.subr.mxu0 0.0
    %1668 = vmatpush1.msra.mxu0 0.0
    %1669 = vmatprep.subr.mxu0 0.0
    %1670 = vmatpush1.msra.mxu0 %v278
    %1671 = vmatprep.subr.mxu0 0.0
    %1672 = vmatpush1.msra.mxu0 %v277
    %1673 = vmatprep.subr.mxu0 0.0
    %1674 = vmatpush1.msra.mxu0 %v276
    %1675 = vmatprep.subr.mxu0 0.0
    %1676 = vmatpush1.msra.mxu0 %v275
    %1677 = vmatprep.subr.mxu0 0.0
    %1678 = vmatpush1.msra.mxu0 %v274
    %1679 = vmatprep.subr.mxu0 0.0
    %1680 = vmatpush1.msra.mxu0 %v273
    %1681 = vmatprep.subr.mxu0 0.0
    %1682 = vmatpush1.msra.mxu0 %v272
    %1683 = vmatprep.subr.mxu0 0.0
    %1684 = vmatpush1.msra.mxu0 %v271
    %1685 = vmatprep.subr.mxu0 0.0
    %1686 = vmatpush2.msra.mxu0 0.0
    %1687 = vmatprep.subr.mxu0 0.0
    %1688 = vmatpush2.msra.mxu0 0.0
    %1689 = vmatprep.subr.mxu0 0.0
    %1690 = vmatpush2.msra.mxu0 0.0
    %1691 = vmatprep.subr.mxu0 0.0
    %1692 = vmatpush2.msra.mxu0 0.0
    %1693 = vmatprep.subr.mxu0 0.0
    %1694 = vmatpush2.msra.mxu0 0.0
    %1695 = vmatprep.subr.mxu0 0.0
    %1696 = vmatpush2.msra.mxu0 0.0
    %1697 = vmatprep.subr.mxu0 0.0
    %1698 = vmatpush2.msra.mxu0 0.0
    %1699 = vmatprep.subr.mxu0 0.0
    %1700 = vmatpush2.msra.mxu0 0.0
    %1701 = vmatprep.subr.mxu0 0.0
    %1702 = vmatpush2.msra.mxu0 0.0
    %1703 = vmatprep.subr.mxu0 0.0
    %1704 = vmatpush2.msra.mxu0 0.0
    %1705 = vmatprep.subr.mxu0 0.0
    %1706 = vmatpush2.msra.mxu0 0.0
    %1707 = vmatprep.subr.mxu0 0.0
    %1708 = vmatpush2.msra.mxu0 0.0
    %1709 = vmatprep.subr.mxu0 0.0
    %1710 = vmatpush2.msra.mxu0 0.0
    %1711 = vmatprep.subr.mxu0 0.0
    %1712 = vmatpush2.msra.mxu0 0.0
    %1713 = vmatprep.subr.mxu0 0.0
    %1714 = vmatpush2.msra.mxu0 0.0
    %1715 = vmatprep.subr.mxu0 0.0
    %1716 = vmatpush2.msra.mxu0 0.0
    %1717 = vmatprep.mubr.f32.mxu0 0.0
    %1718 = vmatmul.mubr.f32.gmra.mxu0 %v1651
    %v1719 = vpop.f32.mrf.mxu0
    %v1720 = vadd.f32 %v284, %v1719
    %v1721 = vpop.f32.mrf.mxu0
    %1722 = vdwg.mxu0
    %v1723 = vtanh.pop %v1720
    %v1724 = vmul.f32 %v1723, %v118
    %v1725 = vadd.f32 %v1724, %v119
    %v1726 = vmul.f32 %v1725, %v1541
    %1728 = vrot.lane.b32.xlu0 %v1725, 64
    %v1729 = vpop.permute.xlu0 %1728
    %v1731 = vmul.f32 %v1725, %v1729
    %1733 = vrot.lane.b32.xlu0 %v1731, 32
    %v1734 = vpop.permute.xlu0 %1733
    %v1736 = vadd.f32 %v1726, %v1734
    %v1737 = vtanh.pop %v1736
    %1739 = vrot.lane.b32.xlu0 %v1737, 64
    %v1740 = vpop.permute.xlu0 %1739
    %v1742 = vmul.f32 %v1725, %v1740
    %1744 = vrot.lane.b32.xlu0 %v1643, 32
    %v1745 = vpop.permute.xlu0 %1744
    %1748 = vrot.lane.b32.xlu0 %v1742, 64
    %v1749 = vpop.permute.xlu0 %1748
    %v1751 = vsel %vm286, %v1745, %v1749
    %v1753 = vsel %vm479, %v1751, 0
    %1755 = vmatprep.subr.mxu0 0.0
    %1756 = vmatpush1.msra.mxu0 0.0
    %1757 = vmatprep.subr.mxu0 0.0
    %1758 = vmatpush1.msra.mxu0 0.0
    %1759 = vmatprep.subr.mxu0 0.0
    %1760 = vmatpush1.msra.mxu0 0.0
    %1761 = vmatprep.subr.mxu0 0.0
    %1762 = vmatpush1.msra.mxu0 0.0
    %1763 = vmatprep.subr.mxu0 0.0
    %1764 = vmatpush1.msra.mxu0 0.0
    %1765 = vmatprep.subr.mxu0 0.0
    %1766 = vmatpush1.msra.mxu0 0.0
    %1767 = vmatprep.subr.mxu0 0.0
    %1768 = vmatpush1.msra.mxu0 0.0
    %1769 = vmatprep.subr.mxu0 0.0
    %1770 = vmatpush1.msra.mxu0 0.0
    %1771 = vmatprep.subr.mxu0 0.0
    %1772 = vmatpush1.msra.mxu0 %v278
    %1773 = vmatprep.subr.mxu0 0.0
    %1774 = vmatpush1.msra.mxu0 %v277
    %1775 = vmatprep.subr.mxu0 0.0
    %1776 = vmatpush1.msra.mxu0 %v276
    %1777 = vmatprep.subr.mxu0 0.0
    %1778 = vmatpush1.msra.mxu0 %v275
    %1779 = vmatprep.subr.mxu0 0.0
    %1780 = vmatpush1.msra.mxu0 %v274
    %1781 = vmatprep.subr.mxu0 0.0
    %1782 = vmatpush1.msra.mxu0 %v273
    %1783 = vmatprep.subr.mxu0 0.0
    %1784 = vmatpush1.msra.mxu0 %v272
    %1785 = vmatprep.subr.mxu0 0.0
    %1786 = vmatpush1.msra.mxu0 %v271
    %1787 = vmatprep.subr.mxu0 0.0
    %1788 = vmatpush2.msra.mxu0 0.0
    %1789 = vmatprep.subr.mxu0 0.0
    %1790 = vmatpush2.msra.mxu0 0.0
    %1791 = vmatprep.subr.mxu0 0.0
    %1792 = vmatpush2.msra.mxu0 0.0
    %1793 = vmatprep.subr.mxu0 0.0
    %1794 = vmatpush2.msra.mxu0 0.0
    %1795 = vmatprep.subr.mxu0 0.0
    %1796 = vmatpush2.msra.mxu0 0.0
    %1797 = vmatprep.subr.mxu0 0.0
    %1798 = vmatpush2.msra.mxu0 0.0
    %1799 = vmatprep.subr.mxu0 0.0
    %1800 = vmatpush2.msra.mxu0 0.0
    %1801 = vmatprep.subr.mxu0 0.0
    %1802 = vmatpush2.msra.mxu0 0.0
    %1803 = vmatprep.subr.mxu0 0.0
    %1804 = vmatpush2.msra.mxu0 0.0
    %1805 = vmatprep.subr.mxu0 0.0
    %1806 = vmatpush2.msra.mxu0 0.0
    %1807 = vmatprep.subr.mxu0 0.0
    %1808 = vmatpush2.msra.mxu0 0.0
    %1809 = vmatprep.subr.mxu0 0.0
    %1810 = vmatpush2.msra.mxu0 0.0
    %1811 = vmatprep.subr.mxu0 0.0
    %1812 = vmatpush2.msra.mxu0 0.0
    %1813 = vmatprep.subr.mxu0 0.0
    %1814 = vmatpush2.msra.mxu0 0.0
    %1815 = vmatprep.subr.mxu0 0.0
    %1816 = vmatpush2.msra.mxu0 0.0
    %1817 = vmatprep.subr.mxu0 0.0
    %1818 = vmatpush2.msra.mxu0 0.0
    %1819 = vmatprep.mubr.f32.mxu0 0.0
    %1820 = vmatmul.mubr.f32.gmra.mxu0 %v1753
    %v1821 = vpop.f32.mrf.mxu0
    %v1822 = vadd.f32 %v284, %v1821
    %v1823 = vpop.f32.mrf.mxu0
    %1824 = vdwg.mxu0
    %v1825 = vtanh.pop %v1822
    %v1826 = vmul.f32 %v1825, %v118
    %v1827 = vadd.f32 %v1826, %v119
    %v1828 = vmul.f32 %v1827, %v1736
    %1830 = vrot.lane.b32.xlu0 %v1827, 64
    %v1831 = vpop.permute.xlu0 %1830
    %v1833 = vmul.f32 %v1827, %v1831
    %1835 = vrot.lane.b32.xlu0 %v1833, 32
    %v1836 = vpop.permute.xlu0 %1835
    %v1838 = vadd.f32 %v1828, %v1836
    %v1839 = vtanh.pop %v1838
    %1841 = vrot.lane.b32.xlu0 %v1839, 64
    %v1842 = vpop.permute.xlu0 %1841
    %v1844 = vmul.f32 %v1827, %v1842
    %v1845 = vld [vmem:[#allocation7] sm:$0xff]
    %v1846 = vld [vmem:[#allocation7 + $0x8] sm:$0xff]
    %v1847 = vld [vmem:[#allocation7 + $0x10] sm:$0xff]
    %v1848 = vld [vmem:[#allocation7 + $0x18] sm:$0xff]
    %v1849 = vld [vmem:[#allocation8] sm:$0x1]
    %v1851 = vlaneseq
    %v1852 = vshrl.u32 %v1851, 7
    %v1853 = vsub.s32 0, %v1852
    %v1854 = vrot.slane %v1849, %v1853
    %1857 = vrot.lane.b32.xlu0 %v1844, 32
    %v1858 = vpop.permute.xlu0 %1857
    %v1859 = vsel %vm286, %v1858, 0
    %1861 = vmatprep.subr.mxu0 0.0
    %1862 = vmatpush1.msra.mxu0 0.0
    %1863 = vmatprep.subr.mxu0 0.0
    %1864 = vmatpush1.msra.mxu0 0.0
    %1865 = vmatprep.subr.mxu0 0.0
    %1866 = vmatpush1.msra.mxu0 0.0
    %1867 = vmatprep.subr.mxu0 0.0
    %1868 = vmatpush1.msra.mxu0 0.0
    %1869 = vmatprep.subr.mxu0 0.0
    %1870 = vmatpush1.msra.mxu0 0.0
    %1871 = vmatprep.subr.mxu0 0.0
    %1872 = vmatpush1.msra.mxu0 0.0
    %1873 = vmatprep.subr.mxu0 0.0
    %1874 = vmatpush1.msra.mxu0 0.0
    %1875 = vmatprep.subr.mxu0 0.0
    %1876 = vmatpush1.msra.mxu0 0.0
    %1877 = vmatprep.subr.mxu0 0.0
    %1878 = vmatpush1.msra.mxu0 0.0
    %1879 = vmatprep.subr.mxu0 0.0
    %1880 = vmatpush1.msra.mxu0 0.0
    %1881 = vmatprep.subr.mxu0 0.0
    %1882 = vmatpush1.msra.mxu0 0.0
    %1883 = vmatprep.subr.mxu0 0.0
    %1884 = vmatpush1.msra.mxu0 0.0
    %1885 = vmatprep.subr.mxu0 0.0
    %1886 = vmatpush1.msra.mxu0 %v1848
    %1887 = vmatprep.subr.mxu0 0.0
    %1888 = vmatpush1.msra.mxu0 %v1847
    %1889 = vmatprep.subr.mxu0 0.0
    %1890 = vmatpush1.msra.mxu0 %v1846
    %1891 = vmatprep.subr.mxu0 0.0
    %1892 = vmatpush1.msra.mxu0 %v1845
    %1893 = vmatprep.subr.mxu0 0.0
    %1894 = vmatpush2.msra.mxu0 0.0
    %1895 = vmatprep.subr.mxu0 0.0
    %1896 = vmatpush2.msra.mxu0 0.0
    %1897 = vmatprep.subr.mxu0 0.0
    %1898 = vmatpush2.msra.mxu0 0.0
    %1899 = vmatprep.subr.mxu0 0.0
    %1900 = vmatpush2.msra.mxu0 0.0
    %1901 = vmatprep.subr.mxu0 0.0
    %1902 = vmatpush2.msra.mxu0 0.0
    %1903 = vmatprep.subr.mxu0 0.0
    %1904 = vmatpush2.msra.mxu0 0.0
    %1905 = vmatprep.subr.mxu0 0.0
    %1906 = vmatpush2.msra.mxu0 0.0
    %1907 = vmatprep.subr.mxu0 0.0
    %1908 = vmatpush2.msra.mxu0 0.0
    %1909 = vmatprep.subr.mxu0 0.0
    %1910 = vmatpush2.msra.mxu0 0.0
    %1911 = vmatprep.subr.mxu0 0.0
    %1912 = vmatpush2.msra.mxu0 0.0
    %1913 = vmatprep.subr.mxu0 0.0
    %1914 = vmatpush2.msra.mxu0 0.0
    %1915 = vmatprep.subr.mxu0 0.0
    %1916 = vmatpush2.msra.mxu0 0.0
    %1917 = vmatprep.subr.mxu0 0.0
    %1918 = vmatpush2.msra.mxu0 0.0
    %1919 = vmatprep.subr.mxu0 0.0
    %1920 = vmatpush2.msra.mxu0 0.0
    %1921 = vmatprep.subr.mxu0 0.0
    %1922 = vmatpush2.msra.mxu0 0.0
    %1923 = vmatprep.subr.mxu0 0.0
    %1924 = vmatpush2.msra.mxu0 0.0
    %1925 = vmatprep.mubr.f32.mxu0 0.0
    %1926 = vmatmul.mubr.f32.gmra.mxu0 %v1859
    %v1927 = vpop.f32.mrf.mxu0
    %v1928 = vadd.f32 %v1854, %v1927
    %v1929 = vpop.f32.mrf.mxu0
    %1930 = vdwg.mxu0
    %v1931 = vmax.f32 %v1928, 0.0
    %v1932 = vld [vmem:[%s8] sm:$0xff]
    %v1933 = vld [vmem:[%s8 + $0x8] sm:$0xff]
    %v1934 = vld [vmem:[%s8 + $0x10] sm:$0xff]
    %v1935 = vld [vmem:[%s8 + $0x18] sm:$0xff]
    %v1936 = vld [vmem:[%s9] sm:$0x1]
    %v1938 = vlaneseq
    %v1939 = vshrl.u32 %v1938, 7
    %v1940 = vsub.s32 0, %v1939
    %v1941 = vrot.slane %v1936, %v1940
    %v1944 = vsel %vm286, %v1931, 0
    %1946 = vmatprep.subr.mxu0 0.0
    %1947 = vmatpush1.msra.mxu0 0.0
    %1948 = vmatprep.subr.mxu0 0.0
    %1949 = vmatpush1.msra.mxu0 0.0
    %1950 = vmatprep.subr.mxu0 0.0
    %1951 = vmatpush1.msra.mxu0 0.0
    %1952 = vmatprep.subr.mxu0 0.0
    %1953 = vmatpush1.msra.mxu0 0.0
    %1954 = vmatprep.subr.mxu0 0.0
    %1955 = vmatpush1.msra.mxu0 0.0
    %1956 = vmatprep.subr.mxu0 0.0
    %1957 = vmatpush1.msra.mxu0 0.0
    %1958 = vmatprep.subr.mxu0 0.0
    %1959 = vmatpush1.msra.mxu0 0.0
    %1960 = vmatprep.subr.mxu0 0.0
    %1961 = vmatpush1.msra.mxu0 0.0
    %1962 = vmatprep.subr.mxu0 0.0
    %1963 = vmatpush1.msra.mxu0 0.0
    %1964 = vmatprep.subr.mxu0 0.0
    %1965 = vmatpush1.msra.mxu0 0.0
    %1966 = vmatprep.subr.mxu0 0.0
    %1967 = vmatpush1.msra.mxu0 0.0
    %1968 = vmatprep.subr.mxu0 0.0
    %1969 = vmatpush1.msra.mxu0 0.0
    %1970 = vmatprep.subr.mxu0 0.0
    %1971 = vmatpush1.msra.mxu0 %v1935
    %1972 = vmatprep.subr.mxu0 0.0
    %1973 = vmatpush1.msra.mxu0 %v1934
    %1974 = vmatprep.subr.mxu0 0.0
    %1975 = vmatpush1.msra.mxu0 %v1933
    %1976 = vmatprep.subr.mxu0 0.0
    %1977 = vmatpush1.msra.mxu0 %v1932
    %1978 = vmatprep.subr.mxu0 0.0
    %1979 = vmatpush2.msra.mxu0 0.0
    %1980 = vmatprep.subr.mxu0 0.0
    %1981 = vmatpush2.msra.mxu0 0.0
    %1982 = vmatprep.subr.mxu0 0.0
    %1983 = vmatpush2.msra.mxu0 0.0
    %1984 = vmatprep.subr.mxu0 0.0
    %1985 = vmatpush2.msra.mxu0 0.0
    %1986 = vmatprep.subr.mxu0 0.0
    %1987 = vmatpush2.msra.mxu0 0.0
    %1988 = vmatprep.subr.mxu0 0.0
    %1989 = vmatpush2.msra.mxu0 0.0
    %1990 = vmatprep.subr.mxu0 0.0
    %1991 = vmatpush2.msra.mxu0 0.0
    %1992 = vmatprep.subr.mxu0 0.0
    %1993 = vmatpush2.msra.mxu0 0.0
    %1994 = vmatprep.subr.mxu0 0.0
    %1995 = vmatpush2.msra.mxu0 0.0
    %1996 = vmatprep.subr.mxu0 0.0
    %1997 = vmatpush2.msra.mxu0 0.0
    %1998 = vmatprep.subr.mxu0 0.0
    %1999 = vmatpush2.msra.mxu0 0.0
    %2000 = vmatprep.subr.mxu0 0.0
    %2001 = vmatpush2.msra.mxu0 0.0
    %2002 = vmatprep.subr.mxu0 0.0
    %2003 = vmatpush2.msra.mxu0 0.0
    %2004 = vmatprep.subr.mxu0 0.0
    %2005 = vmatpush2.msra.mxu0 0.0
    %2006 = vmatprep.subr.mxu0 0.0
    %2007 = vmatpush2.msra.mxu0 0.0
    %2008 = vmatprep.subr.mxu0 0.0
    %2009 = vmatpush2.msra.mxu0 0.0
    %2010 = vmatprep.mubr.f32.mxu0 0.0
    %2011 = vmatmul.mubr.f32.gmra.mxu0 %v1944
    %v2012 = vpop.f32.mrf.mxu0
    %v2013 = vadd.f32 %v1941, %v2012
    %v2014 = vpop.f32.mrf.mxu0
    %2015 = vdwg.mxu0
    %v2016 = vmax.f32 %v2013, 0.0
    %v2017 = vld [vmem:[#allocation10] sm:$0xff]
    %v2018 = vld [vmem:[#allocation10 + $0x8] sm:$0xff]
    %v2019 = vld [vmem:[#allocation10 + $0x10] sm:$0xff]
    %v2020 = vld [vmem:[#allocation10 + $0x18] sm:$0xff]
    %v2021 = vld [vmem:[%s11] sm:$0x1]
    %v2023 = vlaneseq
    %v2024 = vshrl.u32 %v2023, 7
    %v2025 = vsub.s32 0, %v2024
    %v2026 = vrot.slane %v2021, %v2025
    %v2029 = vsel %vm286, %v2016, 0
    %2031 = vmatprep.subr.mxu0 0.0
    %2032 = vmatpush1.msra.mxu0 0.0
    %2033 = vmatprep.subr.mxu0 0.0
    %2034 = vmatpush1.msra.mxu0 0.0
    %2035 = vmatprep.subr.mxu0 0.0
    %2036 = vmatpush1.msra.mxu0 0.0
    %2037 = vmatprep.subr.mxu0 0.0
    %2038 = vmatpush1.msra.mxu0 0.0
    %2039 = vmatprep.subr.mxu0 0.0
    %2040 = vmatpush1.msra.mxu0 0.0
    %2041 = vmatprep.subr.mxu0 0.0
    %2042 = vmatpush1.msra.mxu0 0.0
    %2043 = vmatprep.subr.mxu0 0.0
    %2044 = vmatpush1.msra.mxu0 0.0
    %2045 = vmatprep.subr.mxu0 0.0
    %2046 = vmatpush1.msra.mxu0 0.0
    %2047 = vmatprep.subr.mxu0 0.0
    %2048 = vmatpush1.msra.mxu0 0.0
    %2049 = vmatprep.subr.mxu0 0.0
    %2050 = vmatpush1.msra.mxu0 0.0
    %2051 = vmatprep.subr.mxu0 0.0
    %2052 = vmatpush1.msra.mxu0 0.0
    %2053 = vmatprep.subr.mxu0 0.0
    %2054 = vmatpush1.msra.mxu0 0.0
    %2055 = vmatprep.subr.mxu0 0.0
    %2056 = vmatpush1.msra.mxu0 %v2020
    %2057 = vmatprep.subr.mxu0 0.0
    %2058 = vmatpush1.msra.mxu0 %v2019
    %2059 = vmatprep.subr.mxu0 0.0
    %2060 = vmatpush1.msra.mxu0 %v2018
    %2061 = vmatprep.subr.mxu0 0.0
    %2062 = vmatpush1.msra.mxu0 %v2017
    %2063 = vmatprep.subr.mxu0 0.0
    %2064 = vmatpush2.msra.mxu0 0.0
    %2065 = vmatprep.subr.mxu0 0.0
    %2066 = vmatpush2.msra.mxu0 0.0
    %2067 = vmatprep.subr.mxu0 0.0
    %2068 = vmatpush2.msra.mxu0 0.0
    %2069 = vmatprep.subr.mxu0 0.0
    %2070 = vmatpush2.msra.mxu0 0.0
    %2071 = vmatprep.subr.mxu0 0.0
    %2072 = vmatpush2.msra.mxu0 0.0
    %2073 = vmatprep.subr.mxu0 0.0
    %2074 = vmatpush2.msra.mxu0 0.0
    %2075 = vmatprep.subr.mxu0 0.0
    %2076 = vmatpush2.msra.mxu0 0.0
    %2077 = vmatprep.subr.mxu0 0.0
    %2078 = vmatpush2.msra.mxu0 0.0
    %2079 = vmatprep.subr.mxu0 0.0
    %2080 = vmatpush2.msra.mxu0 0.0
    %2081 = vmatprep.subr.mxu0 0.0
    %2082 = vmatpush2.msra.mxu0 0.0
    %2083 = vmatprep.subr.mxu0 0.0
    %2084 = vmatpush2.msra.mxu0 0.0
    %2085 = vmatprep.subr.mxu0 0.0
    %2086 = vmatpush2.msra.mxu0 0.0
    %2087 = vmatprep.subr.mxu0 0.0
    %2088 = vmatpush2.msra.mxu0 0.0
    %2089 = vmatprep.subr.mxu0 0.0
    %2090 = vmatpush2.msra.mxu0 0.0
    %2091 = vmatprep.subr.mxu0 0.0
    %2092 = vmatpush2.msra.mxu0 0.0
    %2093 = vmatprep.subr.mxu0 0.0
    %2094 = vmatpush2.msra.mxu0 0.0
    %2095 = vmatprep.mubr.f32.mxu0 0.0
    %2096 = vmatmul.mubr.f32.gmra.mxu0 %v2029
    %v2097 = vpop.f32.mrf.mxu0
    %v2098 = vadd.f32 %v2026, %v2097
    %v2099 = vpop.f32.mrf.mxu0
    %2100 = vdwg.mxu0
    %v2101 = vmax.f32 %v2098, 0.0
    %v2102 = vld [vmem:[%s12] sm:$0xff]
    %v2103 = vld [vmem:[%s12 + $0x8] sm:$0xff]
    %v2104 = vld [vmem:[%s12 + $0x10] sm:$0xff]
    %v2105 = vld [vmem:[%s12 + $0x18] sm:$0xff]
    %v2106 = vld [vmem:[#allocation2] sm:$0x1]
    %v2108 = vlaneseq
    %v2109 = vshrl.u32 %v2108, 7
    %v2110 = vsub.s32 0, %v2109
    %v2111 = vrot.slane %v2106, %v2110
    %v2114 = vsel %vm286, %v2101, 0
    %2116 = vmatprep.subr.mxu0 0.0
    %2117 = vmatpush1.msra.mxu0 0.0
    %2118 = vmatprep.subr.mxu0 0.0
    %2119 = vmatpush1.msra.mxu0 0.0
    %2120 = vmatprep.subr.mxu0 0.0
    %2121 = vmatpush1.msra.mxu0 0.0
    %2122 = vmatprep.subr.mxu0 0.0
    %2123 = vmatpush1.msra.mxu0 0.0
    %2124 = vmatprep.subr.mxu0 0.0
    %2125 = vmatpush1.msra.mxu0 0.0
    %2126 = vmatprep.subr.mxu0 0.0
    %2127 = vmatpush1.msra.mxu0 0.0
    %2128 = vmatprep.subr.mxu0 0.0
    %2129 = vmatpush1.msra.mxu0 0.0
    %2130 = vmatprep.subr.mxu0 0.0
    %2131 = vmatpush1.msra.mxu0 0.0
    %2132 = vmatprep.subr.mxu0 0.0
    %2133 = vmatpush1.msra.mxu0 0.0
    %2134 = vmatprep.subr.mxu0 0.0
    %2135 = vmatpush1.msra.mxu0 0.0
    %2136 = vmatprep.subr.mxu0 0.0
    %2137 = vmatpush1.msra.mxu0 0.0
    %2138 = vmatprep.subr.mxu0 0.0
    %2139 = vmatpush1.msra.mxu0 0.0
    %2140 = vmatprep.subr.mxu0 0.0
    %2141 = vmatpush1.msra.mxu0 %v2105
    %2142 = vmatprep.subr.mxu0 0.0
    %2143 = vmatpush1.msra.mxu0 %v2104
    %2144 = vmatprep.subr.mxu0 0.0
    %2145 = vmatpush1.msra.mxu0 %v2103
    %2146 = vmatprep.subr.mxu0 0.0
    %2147 = vmatpush1.msra.mxu0 %v2102
    %2148 = vmatprep.subr.mxu0 0.0
    %2149 = vmatpush2.msra.mxu0 0.0
    %2150 = vmatprep.subr.mxu0 0.0
    %2151 = vmatpush2.msra.mxu0 0.0
    %2152 = vmatprep.subr.mxu0 0.0
    %2153 = vmatpush2.msra.mxu0 0.0
    %2154 = vmatprep.subr.mxu0 0.0
    %2155 = vmatpush2.msra.mxu0 0.0
    %2156 = vmatprep.subr.mxu0 0.0
    %2157 = vmatpush2.msra.mxu0 0.0
    %2158 = vmatprep.subr.mxu0 0.0
    %2159 = vmatpush2.msra.mxu0 0.0
    %2160 = vmatprep.subr.mxu0 0.0
    %2161 = vmatpush2.msra.mxu0 0.0
    %2162 = vmatprep.subr.mxu0 0.0
    %2163 = vmatpush2.msra.mxu0 0.0
    %2164 = vmatprep.subr.mxu0 0.0
    %2165 = vmatpush2.msra.mxu0 0.0
    %2166 = vmatprep.subr.mxu0 0.0
    %2167 = vmatpush2.msra.mxu0 0.0
    %2168 = vmatprep.subr.mxu0 0.0
    %2169 = vmatpush2.msra.mxu0 0.0
    %2170 = vmatprep.subr.mxu0 0.0
    %2171 = vmatpush2.msra.mxu0 0.0
    %2172 = vmatprep.subr.mxu0 0.0
    %2173 = vmatpush2.msra.mxu0 0.0
    %2174 = vmatprep.subr.mxu0 0.0
    %2175 = vmatpush2.msra.mxu0 0.0
    %2176 = vmatprep.subr.mxu0 0.0
    %2177 = vmatpush2.msra.mxu0 0.0
    %2178 = vmatprep.subr.mxu0 0.0
    %2179 = vmatpush2.msra.mxu0 0.0
    %2180 = vmatprep.mubr.f32.mxu0 0.0
    %2181 = vmatmul.mubr.f32.gmra.mxu0 %v2114
    %v2182 = vpop.f32.mrf.mxu0
    %v2183 = vadd.f32 %v2111, %v2182
    %v2184 = vpop.f32.mrf.mxu0
    %2185 = vdwg.mxu0
    %vm2186 = vcmask 7168
    %2187 = vst.msk [vmem:[%s14] sm:$0xff] %vm2186, %v2183
    // Predicated region
    $region78: #{tpu_custom_call.1} parent=1 // pred_check
      _
    $region79: #{tpu_custom_call.1} parent=1 // pred_check_branch
      %2189 = sbr.rel (0) target = $region81
    $region80: #{tpu_custom_call.1} parent=1 // pred_region
      _
    $region81: #{tpu_custom_call.1} parent=1 // pred_fallthru
      _
    // Predicated region
    $region82: #{tpu_custom_call.1} parent=1 // pred_check
      _
    $region83: #{tpu_custom_call.1} parent=1 // pred_check_branch
      %2191 = sbr.rel (0) target = $region85
    $region84: #{tpu_custom_call.1} parent=1 // pred_region
      _
    $region85: #{tpu_custom_call.1} parent=1 // pred_fallthru
      _
    %2192 = vsyncpa [#allocation4], 1
    %2193 = vsyncpa [#allocation6], 1
    %2194 = vsyncpa [#allocation9], 1

</llo_original>
